<compile_context>
chip_gen: v5e
topology: v5e:2x2
jax: 0.10.0
libtpu: 0.0.40
codegen_flags: <defaults>
</compile_context>

<pallas_src>
import functools

import jax
import jax.numpy as jnp
from jax import lax
from jax.experimental import pallas as pl
from jax.experimental.pallas import tpu as pltpu


def _identity(d):
    row = lax.broadcasted_iota(jnp.int32, (d, d), 0)
    col = lax.broadcasted_iota(jnp.int32, (d, d), 1)
    return (row == col).astype(jnp.float32)


def _finalize_loss(out_ref, s11, s22, m1, m2, s12, iden, *, lambd, n_rows, standardize):
    """Turn raw statistics into the scalar CCA loss (written to the SMEM out_ref).

    s11/s22: [D, D] raw Grams X^T X;  m1/m2: [1, D] column sums;
    s12: [1, D] column sums of x1*x2.
    """
    d = s11.shape[0]
    n = jnp.float32(n_rows)
    inv_n = jnp.float32(1.0 / n_rows)
    mu1 = m1 * inv_n
    mu2 = m2 * inv_n

    def as_col(v_row):  # [1, D] row -> [D, 1] column without a transpose/relayout
        return jnp.sum(iden * v_row, axis=1, keepdims=True)

    if standardize:
        # Per-column unbiased variances (ddof=1, matches torch.std) from raw stats.
        diag11 = jnp.sum(s11 * iden, axis=0, keepdims=True)
        diag22 = jnp.sum(s22 * iden, axis=0, keepdims=True)
        inv_nm1 = jnp.float32(1.0 / (n_rows - 1))
        var1 = (diag11 - n * mu1 * mu1) * inv_nm1
        var2 = (diag22 - n * mu2 * mu2) * inv_nm1
        inv_s1 = lax.rsqrt(var1)   # EUP; no epsilon (zero-variance -> Inf/NaN, like torch)
        inv_s2 = lax.rsqrt(var2)

        # C1 = diag(1/s1) (S11/N - mu1 mu1^T) diag(1/s1); likewise C2.
        c1 = (s11 * inv_n - as_col(mu1) * mu1) * (as_col(inv_s1) * inv_s1)
        c2 = (s22 * inv_n - as_col(mu2) * mu2) * (as_col(inv_s2) * inv_s2)

        # trace(C) of the cross matrix C = Z1^T Z2 / N from per-column stats.
        tr_c = jnp.sum((s12 * inv_n - mu1 * mu2) * inv_s1 * inv_s2)
    else:
        # N == 1 branch of the PyTorch module: no standardization.
        c1 = s11 * inv_n
        c2 = s22 * inv_n
        tr_c = jnp.sum(s12) * inv_n

    tr_c1 = jnp.sum(c1 * iden)
    tr_c2 = jnp.sum(c2 * iden)
    # sum((I - C)^2) = sum(C^2) - 2*trace(C) + D
    loss_dec1 = jnp.sum(c1 * c1) - 2.0 * tr_c1 + jnp.float32(d)
    loss_dec2 = jnp.sum(c2 * c2) - 2.0 * tr_c2 + jnp.float32(d)
    out_ref[0, 0] = -tr_c + jnp.float32(lambd) * (loss_dec1 + loss_dec2)


def _cca_fused_kernel(v1_ref, v2_ref, out_ref, aug_ref, acc_ref, m1_ref, m2_ref,
                      *, lambd, n_rows, block_n, d, d_pad, standardize, need_mask):
    """Fused path (D <= 128): one augmented Gram per tile."""
    i = pl.program_id(0)
    n_steps = pl.num_programs(0)

    @pl.when(i == 0)
    def _init():
        aug_ref[...] = jnp.zeros_like(aug_ref)   # zero the padding lanes once
        acc_ref[...] = jnp.zeros_like(acc_ref)
        m1_ref[...] = jnp.zeros_like(m1_ref)
        m2_ref[...] = jnp.zeros_like(m2_ref)

    dn = (((0,), (0,)), ((), ()))   # contract over the row (batch) axis, no .T copies

    def accumulate(x1, x2):
        # Lane-tile-aligned slots: view1 -> lanes [0, d), view2 -> [d_pad, d_pad + d).
        aug_ref[:, 0:d] = x1.astype(aug_ref.dtype)
        aug_ref[:, d_pad:d_pad + d] = x2.astype(aug_ref.dtype)
        xa = aug_ref[...]
        # One fused Gram holds X1^T X1, X2^T X2 and the cross block X1^T X2.
        acc_ref[...] += lax.dot_general(xa, xa, dn, preferred_element_type=jnp.float32)
        # Running column sums (cheap VPU/XLU reductions).
        m1_ref[...] += jnp.sum(x1.astype(jnp.float32), axis=0, keepdims=True)
        m2_ref[...] += jnp.sum(x2.astype(jnp.float32), axis=0, keepdims=True)

    if need_mask:
        @pl.when(i < n_steps - 1)
        def _full_tile():
            accumulate(v1_ref[...], v2_ref[...])

        @pl.when(i == n_steps - 1)
        def _ragged_tile():
            x1 = v1_ref[...]
            x2 = v2_ref[...]
            rows = i * block_n + lax.broadcasted_iota(jnp.int32, x1.shape, 0)
            valid = rows < n_rows
            accumulate(jnp.where(valid, x1, jnp.zeros_like(x1)),
                       jnp.where(valid, x2, jnp.zeros_like(x2)))
    else:
        accumulate(v1_ref[...], v2_ref[...])

    @pl.when(i == n_steps - 1)
    def _finalize():
        iden = _identity(d)
        s11 = acc_ref[0:d, 0:d]
        s22 = acc_ref[d_pad:d_pad + d, d_pad:d_pad + d]
        cross = acc_ref[0:d, d_pad:d_pad + d]
        s12 = jnp.sum(cross * iden, axis=0, keepdims=True)   # diag of the cross block
        _finalize_loss(out_ref, s11, s22, m1_ref[...], m2_ref[...], s12, iden,
                       lambd=lambd, n_rows=n_rows, standardize=standardize)


def _cca_split_kernel(v1_ref, v2_ref, out_ref,
                      s11_ref, s22_ref, m1_ref, m2_ref, s12_ref,
                      *, lambd, n_rows, block_n, standardize, need_mask, gram_dtype):
    """Fallback path (D > 128): separate per-view Grams + column-sum reductions."""
    i = pl.program_id(0)
    n_steps = pl.num_programs(0)
    d = s11_ref.shape[0]

    @pl.when(i == 0)
    def _init():
        s11_ref[...] = jnp.zeros_like(s11_ref)
        s22_ref[...] = jnp.zeros_like(s22_ref)
        m1_ref[...] = jnp.zeros_like(m1_ref)
        m2_ref[...] = jnp.zeros_like(m2_ref)
        s12_ref[...] = jnp.zeros_like(s12_ref)

    dn = (((0,), (0,)), ((), ()))

    def accumulate(x1, x2):
        x1g = x1.astype(gram_dtype)
        x2g = x2.astype(gram_dtype)
        s11_ref[...] += lax.dot_general(x1g, x1g, dn, preferred_element_type=jnp.float32)
        s22_ref[...] += lax.dot_general(x2g, x2g, dn, preferred_element_type=jnp.float32)
        x1f = x1.astype(jnp.float32)
        x2f = x2.astype(jnp.float32)
        m1_ref[...] += jnp.sum(x1f, axis=0, keepdims=True)
        m2_ref[...] += jnp.sum(x2f, axis=0, keepdims=True)
        s12_ref[...] += jnp.sum(x1f * x2f, axis=0, keepdims=True)

    if need_mask:
        @pl.when(i < n_steps - 1)
        def _full_tile():
            accumulate(v1_ref[...], v2_ref[...])

        @pl.when(i == n_steps - 1)
        def _ragged_tile():
            x1 = v1_ref[...]
            x2 = v2_ref[...]
            rows = i * block_n + lax.broadcasted_iota(jnp.int32, x1.shape, 0)
            valid = rows < n_rows
            accumulate(jnp.where(valid, x1, jnp.zeros_like(x1)),
                       jnp.where(valid, x2, jnp.zeros_like(x2)))
    else:
        accumulate(v1_ref[...], v2_ref[...])

    @pl.when(i == n_steps - 1)
    def _finalize():
        iden = _identity(d)
        _finalize_loss(out_ref, s11_ref[...], s22_ref[...], m1_ref[...], m2_ref[...],
                       s12_ref[...], iden, lambd=lambd, n_rows=n_rows,
                       standardize=standardize)


def cca_loss(view1: jax.Array, view2: jax.Array, lambd: float = 1e-5,
             block_rows: int | None = None) -> jax.Array:
    assert view1.shape == view2.shape and view1.ndim == 2
    N, D = view1.shape
    standardize = N > 1   # static branch, mirrors PyTorch `if N == 1`

    itemsize = view1.dtype.itemsize
    # Feed bf16 operands straight to the MXU (f32 accumulation); otherwise f32.
    gram_dtype = jnp.bfloat16 if view1.dtype == jnp.bfloat16 else jnp.float32
    gram_isize = 2 if gram_dtype == jnp.bfloat16 else 4

    # Fused augmented Gram while both view slots fit one 256-wide MXU tile.
    fused = D <= 128
    d_pad = 128 * ((D + 127) // 128)
    w_pad = 2 * d_pad

    if block_rows is None:
        # ~2 MiB per input stream buffer (amortizes the ~0.35us per-grid-step cost) ...
        block_rows = (2 * 1024 * 1024) // max(1, D * itemsize)
        if fused:
            # ... capped so the fused staging buffer stays <= ~8 MiB.
            block_rows = min(block_rows, (8 * 1024 * 1024) // (w_pad * gram_isize))
        block_rows = max(256, block_rows)
    if N <= block_rows:
        block_n = N
    else:
        block_n = max(8, (block_rows // 8) * 8)   # streamed tiles: multiple of 8 rows
    num_blocks = pl.cdiv(N, block_n)
    need_mask = (N % block_n) != 0

    in_specs = [pl.BlockSpec((block_n, D), lambda i: (i, 0)),
                pl.BlockSpec((block_n, D), lambda i: (i, 0))]
    out_spec = pl.BlockSpec(memory_space=pltpu.MemorySpace.SMEM)

    if fused:
        kernel = functools.partial(
            _cca_fused_kernel, lambd=float(lambd), n_rows=N, block_n=block_n,
            d=D, d_pad=d_pad, standardize=standardize, need_mask=need_mask)
        scratch_shapes = [
            pltpu.VMEM((block_n, w_pad), gram_dtype),   # fused [x1 | x2] staging tile
            pltpu.VMEM((w_pad, w_pad), jnp.float32),    # fused Gram accumulator
            pltpu.VMEM((1, D), jnp.float32),            # column sums of x1
            pltpu.VMEM((1, D), jnp.float32),            # column sums of x2
        ]
        scratch_bytes = 2 * block_n * w_pad * gram_isize + w_pad * w_pad * 4
    else:
        kernel = functools.partial(
            _cca_split_kernel, lambd=float(lambd), n_rows=N, block_n=block_n,
            standardize=standardize, need_mask=need_mask, gram_dtype=gram_dtype)
        scratch_shapes = [
            pltpu.VMEM((D, D), jnp.float32),            # X1^T X1
            pltpu.VMEM((D, D), jnp.float32),            # X2^T X2
            pltpu.VMEM((1, D), jnp.float32),            # column sums of x1
            pltpu.VMEM((1, D), jnp.float32),            # column sums of x2
            pltpu.VMEM((1, D), jnp.float32),            # column sums of x1*x2
        ]
        scratch_bytes = 2 * D * D * 4

    in_bytes = 2 * 2 * block_n * D * itemsize   # 2 views, double-buffered by Pallas
    vmem_limit = int(min(120 * 2 ** 20,
                         max(24 * 2 ** 20, (in_bytes + scratch_bytes) * 1.3)))

    out = pl.pallas_call(
        kernel,
        out_shape=jax.ShapeDtypeStruct((1, 1), jnp.float32),
        grid_spec=pltpu.PrefetchScalarGridSpec(
            num_scalar_prefetch=0,
            grid=(num_blocks,),
            in_specs=in_specs,
            out_specs=out_spec,
            scratch_shapes=scratch_shapes,
        ),
        compiler_params=pltpu.CompilerParams(
            dimension_semantics=("arbitrary",),   # reduction over the batch axis
            vmem_limit_bytes=vmem_limit,
        ),
    )(view1, view2)
    return out[0, 0]


def _cca_loss_ref(view1, view2, lambd=1e-5):
    # Pure-JAX reference mirroring the PyTorch forward (validation only).
    N = view1.shape[0]
    v1 = view1.astype(jnp.float32)
    v2 = view2.astype(jnp.float32)
    if N == 1:
        z1, z2 = v1, v2
    else:
        z1 = (v1 - v1.mean(0)) / v1.std(0, ddof=1)
        z2 = (v2 - v2.mean(0)) / v2.std(0, ddof=1)
    c = z1.T @ z2 / N
    c1 = z1.T @ z1 / N
    c2 = z2.T @ z2 / N
    iden = jnp.eye(c.shape[0], dtype=jnp.float32)
    loss_inv = -jnp.trace(c)
    loss_dec1 = jnp.sum((iden - c1) ** 2)
    loss_dec2 = jnp.sum((iden - c2) ** 2)
    return loss_inv + lambd * (loss_dec1 + loss_dec2)


if __name__ == "__main__":
    key = jax.random.PRNGKey(0)
    k1, k2, k3, k4, k5, k6 = jax.random.split(key, 6)

    # 1) Small case: [batch_size, projection_dim] = [8, 32] (single tile, fused path).
    v1 = jax.random.normal(k1, (8, 32), dtype=jnp.float32)
    v2 = jax.random.normal(k2, (8, 32), dtype=jnp.float32)
    out = cca_loss(v1, v2, lambd=1e-5)
    jax.block_until_ready(out)
    ref = _cca_loss_ref(v1, v2, lambd=1e-5)
    assert jnp.allclose(out, ref, rtol=1e-3, atol=1e-3), (out, ref)

    # 2) Streamed multi-tile path with a ragged last tile (masked branch exercised).
    v1b = jax.random.normal(k3, (2000, 32), dtype=jnp.float32)
    v2b = jax.random.normal(k4, (2000, 32), dtype=jnp.float32)
    out_b = cca_loss(v1b, v2b, lambd=1e-5, block_rows=256)
    jax.block_until_ready(out_b)
    ref_b = _cca_loss_ref(v1b, v2b, lambd=1e-5)
    assert jnp.allclose(out_b, ref_b, rtol=1e-3, atol=1e-3), (out_b, ref_b)

    # 3) D > 128 exercises the separate-Gram fallback path.
    v1c = jax.random.normal(k5, (64, 160), dtype=jnp.float32)
    v2c = jax.random.normal(k6, (64, 160), dtype=jnp.float32)
    out_c = cca_loss(v1c, v2c, lambd=1e-5)
    jax.block_until_ready(out_c)
    ref_c = _cca_loss_ref(v1c, v2c, lambd=1e-5)
    assert jnp.allclose(out_c, ref_c, rtol=1e-3, atol=2e-3), (out_c, ref_c)

    # 4) N == 1 branch (no standardization), mirrors the PyTorch special case.
    v1d = jax.random.normal(k1, (1, 32), dtype=jnp.float32)
    v2d = jax.random.normal(k2, (1, 32), dtype=jnp.float32)
    out_d = cca_loss(v1d, v2d, lambd=1e-5)
    jax.block_until_ready(out_d)
    ref_d = _cca_loss_ref(v1d, v2d, lambd=1e-5)
    assert jnp.allclose(out_d, ref_d, rtol=1e-3, atol=1e-3), (out_d, ref_d)

    print("KERNEL_OK")
</pallas_src>

<mosaic_0001>
module attributes {stable_mosaic.version = 11 : i64} {
  func.func @_cca_fused_kernel(%arg0: i32, %arg1: memref<8x32xf32, #tpu.memory_space<vmem>>, %arg2: memref<8x32xf32, #tpu.memory_space<vmem>>, %arg3: memref<1x1xf32, #tpu.memory_space<smem>>, %arg4: memref<8x256xf32, #tpu.memory_space<vmem>>, %arg5: memref<256x256xf32, #tpu.memory_space<vmem>>, %arg6: memref<1x32xf32, #tpu.memory_space<vmem>>, %arg7: memref<1x32xf32, #tpu.memory_space<vmem>>) attributes {dimension_semantics = [#tpu.dimension_semantics<arbitrary>], iteration_bounds = array<i64: 1>, scalar_prefetch = 0 : i64, scratch_operands = 4 : i64, tpu.core_type = #tpu.core_type<tc>, window_params = [{transform_indices = @transform_0, window_bounds = array<i64: 8, 32>}, {transform_indices = @transform_1, window_bounds = array<i64: 8, 32>}, {transform_indices = @transform_2, window_bounds = array<i64: 1, 1>}]} {
    %c0_i32 = arith.constant 0 : i32
    %0 = arith.cmpi eq, %arg0, %c0_i32 : i32
    %1 = arith.extui %0 : i1 to i32
    %c0_i32_0 = arith.constant 0 : i32
    %2 = arith.cmpi ne, %1, %c0_i32_0 : i32
    scf.if %2 {
      %cst_25 = arith.constant 0.000000e+00 : f32
      %25 = vector.broadcast %cst_25 : f32 to vector<8x256xf32>
      %c0_26 = arith.constant 0 : index
      %c0_27 = arith.constant 0 : index
      %26 = vector.load %arg4[%c0_26, %c0_27] : memref<8x256xf32, #tpu.memory_space<vmem>>, vector<8x256xf32>
      tpu.vector_store %arg4[%c0_26, %c0_27], %25 {strides = array<i32>} : memref<8x256xf32, #tpu.memory_space<vmem>>, vector<8x256xf32>,
      %cst_28 = arith.constant 0.000000e+00 : f32
      %27 = vector.broadcast %cst_28 : f32 to vector<256x256xf32>
      %c0_29 = arith.constant 0 : index
      %c0_30 = arith.constant 0 : index
      %28 = vector.load %arg5[%c0_29, %c0_30] : memref<256x256xf32, #tpu.memory_space<vmem>>, vector<256x256xf32>
      tpu.vector_store %arg5[%c0_29, %c0_30], %27 {strides = array<i32>} : memref<256x256xf32, #tpu.memory_space<vmem>>, vector<256x256xf32>,
      %cst_31 = arith.constant 0.000000e+00 : f32
      %29 = vector.broadcast %cst_31 : f32 to vector<1x32xf32>
      %c0_32 = arith.constant 0 : index
      %c0_33 = arith.constant 0 : index
      %30 = vector.load %arg6[%c0_32, %c0_33] : memref<1x32xf32, #tpu.memory_space<vmem>>, vector<1x32xf32>
      tpu.vector_store %arg6[%c0_32, %c0_33], %29 {strides = array<i32>} : memref<1x32xf32, #tpu.memory_space<vmem>>, vector<1x32xf32>,
      %cst_34 = arith.constant 0.000000e+00 : f32
      %31 = vector.broadcast %cst_34 : f32 to vector<1x32xf32>
      %c0_35 = arith.constant 0 : index
      %c0_36 = arith.constant 0 : index
      %32 = vector.load %arg7[%c0_35, %c0_36] : memref<1x32xf32, #tpu.memory_space<vmem>>, vector<1x32xf32>
      tpu.vector_store %arg7[%c0_35, %c0_36], %31 {strides = array<i32>} : memref<1x32xf32, #tpu.memory_space<vmem>>, vector<1x32xf32>,
    } else {
    }
    %c0 = arith.constant 0 : index
    %c0_1 = arith.constant 0 : index
    %3 = vector.load %arg1[%c0, %c0_1] : memref<8x32xf32, #tpu.memory_space<vmem>>, vector<8x32xf32>
    %c0_2 = arith.constant 0 : index
    %c0_3 = arith.constant 0 : index
    %4 = vector.load %arg2[%c0_2, %c0_3] : memref<8x32xf32, #tpu.memory_space<vmem>>, vector<8x32xf32>
    %c0_4 = arith.constant 0 : index
    %c0_5 = arith.constant 0 : index
    %5 = vector.load %arg4[%c0_4, %c0_5] : memref<8x256xf32, #tpu.memory_space<vmem>>, vector<8x32xf32>
    tpu.vector_store %arg4[%c0_4, %c0_5], %3 {strides = array<i32>} : memref<8x256xf32, #tpu.memory_space<vmem>>, vector<8x32xf32>,
    %c0_6 = arith.constant 0 : index
    %c128 = arith.constant 128 : index
    %6 = vector.load %arg4[%c0_6, %c128] : memref<8x256xf32, #tpu.memory_space<vmem>>, vector<8x32xf32>
    tpu.vector_store %arg4[%c0_6, %c128], %4 {strides = array<i32>} : memref<8x256xf32, #tpu.memory_space<vmem>>, vector<8x32xf32>,
    %c0_7 = arith.constant 0 : index
    %c0_8 = arith.constant 0 : index
    %7 = vector.load %arg4[%c0_7, %c0_8] : memref<8x256xf32, #tpu.memory_space<vmem>>, vector<8x256xf32>
    %c0_9 = arith.constant 0 : index
    %c0_10 = arith.constant 0 : index
    %8 = vector.load %arg5[%c0_9, %c0_10] : memref<256x256xf32, #tpu.memory_space<vmem>>, vector<256x256xf32>
    %cst = arith.constant dense<0.000000e+00> : vector<256x256xf32>
    %9 = tpu.matmul %7, %7, %cst {dimension_numbers = #tpu.dot_dimension_numbers<[0], [0], [1], [1], [0, 1, 1, 1], [], []>} : vector<8x256xf32>, vector<8x256xf32>, vector<256x256xf32> -> vector<256x256xf32>
    %10 = arith.addf %8, %9 : vector<256x256xf32>
    %c0_11 = arith.constant 0 : index
    %c0_12 = arith.constant 0 : index
    %11 = vector.load %arg5[%c0_11, %c0_12] : memref<256x256xf32, #tpu.memory_space<vmem>>, vector<256x256xf32>
    tpu.vector_store %arg5[%c0_11, %c0_12], %10 {strides = array<i32>} : memref<256x256xf32, #tpu.memory_space<vmem>>, vector<256x256xf32>,
    %c0_13 = arith.constant 0 : index
    %c0_14 = arith.constant 0 : index
    %12 = vector.load %arg6[%c0_13, %c0_14] : memref<1x32xf32, #tpu.memory_space<vmem>>, vector<1x32xf32>
    %cst_15 = arith.constant dense<0.000000e+00> : vector<32xf32>
    %13 = vector.multi_reduction <add>, %3, %cst_15 [0] : vector<8x32xf32> to vector<32xf32>
    %14 = vector.shape_cast %13 : vector<32xf32> to vector<1x32xf32>
    %15 = arith.addf %12, %14 : vector<1x32xf32>
    %c0_16 = arith.constant 0 : index
    %c0_17 = arith.constant 0 : index
    %16 = vector.load %arg6[%c0_16, %c0_17] : memref<1x32xf32, #tpu.memory_space<vmem>>, vector<1x32xf32>
    tpu.vector_store %arg6[%c0_16, %c0_17], %15 {strides = array<i32>} : memref<1x32xf32, #tpu.memory_space<vmem>>, vector<1x32xf32>,
    %c0_18 = arith.constant 0 : index
    %c0_19 = arith.constant 0 : index
    %17 = vector.load %arg7[%c0_18, %c0_19] : memref<1x32xf32, #tpu.memory_space<vmem>>, vector<1x32xf32>
    %cst_20 = arith.constant dense<0.000000e+00> : vector<32xf32>
    %18 = vector.multi_reduction <add>, %4, %cst_20 [0] : vector<8x32xf32> to vector<32xf32>
    %19 = vector.shape_cast %18 : vector<32xf32> to vector<1x32xf32>
    %20 = arith.addf %17, %19 : vector<1x32xf32>
    %c0_21 = arith.constant 0 : index
    %c0_22 = arith.constant 0 : index
    %21 = vector.load %arg7[%c0_21, %c0_22] : memref<1x32xf32, #tpu.memory_space<vmem>>, vector<1x32xf32>
    tpu.vector_store %arg7[%c0_21, %c0_22], %20 {strides = array<i32>} : memref<1x32xf32, #tpu.memory_space<vmem>>, vector<1x32xf32>,
    %c0_i32_23 = arith.constant 0 : i32
    %22 = arith.cmpi eq, %arg0, %c0_i32_23 : i32
    %23 = arith.extui %22 : i1 to i32
    %c0_i32_24 = arith.constant 0 : i32
    %24 = arith.cmpi ne, %23, %c0_i32_24 : i32
    scf.if %24 {
      %25 = tpu.iota {dimensions = array<i32: 0>} : vector<32x32xi32>
      %26 = tpu.iota {dimensions = array<i32: 1>} : vector<32x32xi32>
      %27 = arith.cmpi eq, %25, %26 : vector<32x32xi32>
      %28 = arith.extui %27 : vector<32x32xi1> to vector<32x32xi32>
      %29 = arith.sitofp %28 : vector<32x32xi32> to vector<32x32xf32>
      %c0_25 = arith.constant 0 : index
      %c0_26 = arith.constant 0 : index
      %30 = vector.load %arg5[%c0_25, %c0_26] : memref<256x256xf32, #tpu.memory_space<vmem>>, vector<32x32xf32>
      %c128_27 = arith.constant 128 : index
      %c128_28 = arith.constant 128 : index
      %31 = vector.load %arg5[%c128_27, %c128_28] : memref<256x256xf32, #tpu.memory_space<vmem>>, vector<32x32xf32>
      %c0_29 = arith.constant 0 : index
      %c128_30 = arith.constant 128 : index
      %32 = vector.load %arg5[%c0_29, %c128_30] : memref<256x256xf32, #tpu.memory_space<vmem>>, vector<32x32xf32>
      %33 = arith.mulf %32, %29 : vector<32x32xf32>
      %cst_31 = arith.constant dense<0.000000e+00> : vector<32xf32>
      %34 = vector.multi_reduction <add>, %33, %cst_31 [0] : vector<32x32xf32> to vector<32xf32>
      %35 = vector.shape_cast %34 : vector<32xf32> to vector<1x32xf32>
      %c0_32 = arith.constant 0 : index
      %c0_33 = arith.constant 0 : index
      %36 = vector.load %arg6[%c0_32, %c0_33] : memref<1x32xf32, #tpu.memory_space<vmem>>, vector<1x32xf32>
      %c0_34 = arith.constant 0 : index
      %c0_35 = arith.constant 0 : index
      %37 = vector.load %arg7[%c0_34, %c0_35] : memref<1x32xf32, #tpu.memory_space<vmem>>, vector<1x32xf32>
      %cst_36 = arith.constant 1.250000e-01 : f32
      %38 = vector.broadcast %cst_36 : f32 to vector<1x32xf32>
      %39 = arith.mulf %36, %38 : vector<1x32xf32>
      %cst_37 = arith.constant 1.250000e-01 : f32
      %40 = vector.broadcast %cst_37 : f32 to vector<1x32xf32>
      %41 = arith.mulf %37, %40 : vector<1x32xf32>
      %42 = arith.mulf %30, %29 : vector<32x32xf32>
      %cst_38 = arith.constant dense<0.000000e+00> : vector<32xf32>
      %43 = vector.multi_reduction <add>, %42, %cst_38 [0] : vector<32x32xf32> to vector<32xf32>
      %44 = vector.shape_cast %43 : vector<32xf32> to vector<1x32xf32>
      %45 = arith.mulf %31, %29 : vector<32x32xf32>
      %cst_39 = arith.constant dense<0.000000e+00> : vector<32xf32>
      %46 = vector.multi_reduction <add>, %45, %cst_39 [0] : vector<32x32xf32> to vector<32xf32>
      %47 = vector.shape_cast %46 : vector<32xf32> to vector<1x32xf32>
      %cst_40 = arith.constant 8.000000e+00 : f32
      %48 = vector.broadcast %cst_40 : f32 to vector<1x32xf32>
      %49 = arith.mulf %48, %39 : vector<1x32xf32>
      %50 = arith.mulf %49, %39 : vector<1x32xf32>
      %51 = arith.subf %44, %50 : vector<1x32xf32>
      %cst_41 = arith.constant 0.142857149 : f32
      %52 = vector.broadcast %cst_41 : f32 to vector<1x32xf32>
      %53 = arith.mulf %51, %52 : vector<1x32xf32>
      %cst_42 = arith.constant 8.000000e+00 : f32
      %54 = vector.broadcast %cst_42 : f32 to vector<1x32xf32>
      %55 = arith.mulf %54, %41 : vector<1x32xf32>
      %56 = arith.mulf %55, %41 : vector<1x32xf32>
      %57 = arith.subf %47, %56 : vector<1x32xf32>
      %cst_43 = arith.constant 0.142857149 : f32
      %58 = vector.broadcast %cst_43 : f32 to vector<1x32xf32>
      %59 = arith.mulf %57, %58 : vector<1x32xf32>
      %60 = math.rsqrt %53 : vector<1x32xf32>
      %61 = math.rsqrt %59 : vector<1x32xf32>
      %cst_44 = arith.constant 1.250000e-01 : f32
      %62 = vector.broadcast %cst_44 : f32 to vector<32x32xf32>
      %63 = arith.mulf %30, %62 : vector<32x32xf32>
      %64 = vector.broadcast %39 : vector<1x32xf32> to vector<32x32xf32>
      %65 = arith.mulf %29, %64 : vector<32x32xf32>
      %cst_45 = arith.constant dense<0.000000e+00> : vector<32xf32>
      %66 = vector.multi_reduction <add>, %65, %cst_45 [1] : vector<32x32xf32> to vector<32xf32>
      %67 = vector.shape_cast %66 : vector<32xf32> to vector<32x1xf32>
      %68 = vector.broadcast %67 : vector<32x1xf32> to vector<32x32xf32>
      %69 = vector.broadcast %39 : vector<1x32xf32> to vector<32x32xf32>
      %70 = arith.mulf %68, %69 : vector<32x32xf32>
      %71 = arith.subf %63, %70 : vector<32x32xf32>
      %72 = vector.broadcast %60 : vector<1x32xf32> to vector<32x32xf32>
      %73 = arith.mulf %29, %72 : vector<32x32xf32>
      %cst_46 = arith.constant dense<0.000000e+00> : vector<32xf32>
      %74 = vector.multi_reduction <add>, %73, %cst_46 [1] : vector<32x32xf32> to vector<32xf32>
      %75 = vector.shape_cast %74 : vector<32xf32> to vector<32x1xf32>
      %76 = vector.broadcast %75 : vector<32x1xf32> to vector<32x32xf32>
      %77 = vector.broadcast %60 : vector<1x32xf32> to vector<32x32xf32>
      %78 = arith.mulf %76, %77 : vector<32x32xf32>
      %79 = arith.mulf %71, %78 : vector<32x32xf32>
      %cst_47 = arith.constant 1.250000e-01 : f32
      %80 = vector.broadcast %cst_47 : f32 to vector<32x32xf32>
      %81 = arith.mulf %31, %80 : vector<32x32xf32>
      %82 = vector.broadcast %41 : vector<1x32xf32> to vector<32x32xf32>
      %83 = arith.mulf %29, %82 : vector<32x32xf32>
      %cst_48 = arith.constant dense<0.000000e+00> : vector<32xf32>
      %84 = vector.multi_reduction <add>, %83, %cst_48 [1] : vector<32x32xf32> to vector<32xf32>
      %85 = vector.shape_cast %84 : vector<32xf32> to vector<32x1xf32>
      %86 = vector.broadcast %85 : vector<32x1xf32> to vector<32x32xf32>
      %87 = vector.broadcast %41 : vector<1x32xf32> to vector<32x32xf32>
      %88 = arith.mulf %86, %87 : vector<32x32xf32>
      %89 = arith.subf %81, %88 : vector<32x32xf32>
      %90 = vector.broadcast %61 : vector<1x32xf32> to vector<32x32xf32>
      %91 = arith.mulf %29, %90 : vector<32x32xf32>
      %cst_49 = arith.constant dense<0.000000e+00> : vector<32xf32>
      %92 = vector.multi_reduction <add>, %91, %cst_49 [1] : vector<32x32xf32> to vector<32xf32>
      %93 = vector.shape_cast %92 : vector<32xf32> to vector<32x1xf32>
      %94 = vector.broadcast %93 : vector<32x1xf32> to vector<32x32xf32>
      %95 = vector.broadcast %61 : vector<1x32xf32> to vector<32x32xf32>
      %96 = arith.mulf %94, %95 : vector<32x32xf32>
      %97 = arith.mulf %89, %96 : vector<32x32xf32>
      %cst_50 = arith.constant 1.250000e-01 : f32
      %98 = vector.broadcast %cst_50 : f32 to vector<1x32xf32>
      %99 = arith.mulf %35, %98 : vector<1x32xf32>
      %100 = arith.mulf %39, %41 : vector<1x32xf32>
      %101 = arith.subf %99, %100 : vector<1x32xf32>
      %102 = arith.mulf %101, %60 : vector<1x32xf32>
      %103 = arith.mulf %102, %61 : vector<1x32xf32>
      %104 = vector.shape_cast %103 : vector<1x32xf32> to vector<1x1x32xf32>
      %cst_51 = arith.constant dense<0.000000e+00> : vector<1xf32>
      %105 = vector.multi_reduction <add>, %104, %cst_51 [1, 2] : vector<1x1x32xf32> to vector<1xf32>
      %106 = vector.shape_cast %105 : vector<1xf32> to vector<1x1x1xf32>
      %107 = vector.extract %106[0, 0, 0] : f32 from vector<1x1x1xf32>
      %108 = arith.mulf %79, %29 : vector<32x32xf32>
      %109 = vector.shape_cast %108 : vector<32x32xf32> to vector<1x32x32xf32>
      %cst_52 = arith.constant dense<0.000000e+00> : vector<1xf32>
      %110 = vector.multi_reduction <add>, %109, %cst_52 [1, 2] : vector<1x32x32xf32> to vector<1xf32>
      %111 = vector.shape_cast %110 : vector<1xf32> to vector<1x1x1xf32>
      %112 = vector.extract %111[0, 0, 0] : f32 from vector<1x1x1xf32>
      %113 = arith.mulf %97, %29 : vector<32x32xf32>
      %114 = vector.shape_cast %113 : vector<32x32xf32> to vector<1x32x32xf32>
      %cst_53 = arith.constant dense<0.000000e+00> : vector<1xf32>
      %115 = vector.multi_reduction <add>, %114, %cst_53 [1, 2] : vector<1x32x32xf32> to vector<1xf32>
      %116 = vector.shape_cast %115 : vector<1xf32> to vector<1x1x1xf32>
      %117 = vector.extract %116[0, 0, 0] : f32 from vector<1x1x1xf32>
      %118 = arith.mulf %79, %79 : vector<32x32xf32>
      %119 = vector.shape_cast %118 : vector<32x32xf32> to vector<1x32x32xf32>
      %cst_54 = arith.constant dense<0.000000e+00> : vector<1xf32>
      %120 = vector.multi_reduction <add>, %119, %cst_54 [1, 2] : vector<1x32x32xf32> to vector<1xf32>
      %121 = vector.shape_cast %120 : vector<1xf32> to vector<1x1x1xf32>
      %122 = vector.extract %121[0, 0, 0] : f32 from vector<1x1x1xf32>
      %cst_55 = arith.constant 2.000000e+00 : f32
      %123 = arith.mulf %cst_55, %112 : f32
      %124 = arith.subf %122, %123 : f32
      %cst_56 = arith.constant 3.200000e+01 : f32
      %125 = arith.addf %124, %cst_56 : f32
      %126 = arith.mulf %97, %97 : vector<32x32xf32>
      %127 = vector.shape_cast %126 : vector<32x32xf32> to vector<1x32x32xf32>
      %cst_57 = arith.constant dense<0.000000e+00> : vector<1xf32>
      %128 = vector.multi_reduction <add>, %127, %cst_57 [1, 2] : vector<1x32x32xf32> to vector<1xf32>
      %129 = vector.shape_cast %128 : vector<1xf32> to vector<1x1x1xf32>
      %130 = vector.extract %129[0, 0, 0] : f32 from vector<1x1x1xf32>
      %cst_58 = arith.constant 2.000000e+00 : f32
      %131 = arith.mulf %cst_58, %117 : f32
      %132 = arith.subf %130, %131 : f32
      %cst_59 = arith.constant 3.200000e+01 : f32
      %133 = arith.addf %132, %cst_59 : f32
      %cst_60 = arith.constant 0.000000e+00 : f32
      %134 = arith.subf %cst_60, %107 : f32
      %135 = arith.addf %125, %133 : f32
      %cst_61 = arith.constant 9.99999974E-6 : f32
      %136 = arith.mulf %cst_61, %135 : f32
      %137 = arith.addf %134, %136 : f32
      %c0_62 = arith.constant 0 : index
      %c0_63 = arith.constant 0 : index
      %138 = memref.load %arg3[%c0_62, %c0_63] : memref<1x1xf32, #tpu.memory_space<smem>>
      memref.store %137, %arg3[%c0_62, %c0_63] : memref<1x1xf32, #tpu.memory_space<smem>>
    } else {
    }
    return
  }
  func.func @transform_0(%arg0: i32) -> (i32, i32) {
    %c0_i32 = arith.constant 0 : i32
    %c0_i32_0 = arith.constant 0 : i32
    return %arg0, %c0_i32 : i32, i32
  }
  func.func @transform_1(%arg0: i32) -> (i32, i32) {
    %c0_i32 = arith.constant 0 : i32
    %c0_i32_0 = arith.constant 0 : i32
    return %arg0, %c0_i32 : i32, i32
  }
  func.func @transform_2(%arg0: i32) -> (i32, i32) {
    %c0_i32 = arith.constant 0 : i32
    %c0_i32_0 = arith.constant 0 : i32
    %c0_i32_1 = arith.constant 0 : i32
    return %c0_i32, %c0_i32_0 : i32, i32
  }
}

</mosaic_0001>

<llo_original>
// kernel: tpu_custom_call.1
$region0: #{tpu_custom_call.1}
  #allocation0 [shape = 'u32[]', space=smem, size = 0x4, offset = 0x4, fixed_abs, tag = 'smem constant byte address 0x4 - core index']
  #allocation1 [shape = 'u32[72,128]{1,0:T(1,128)}', space=vmem, size = 0x9000, scoped, tag = 'internal scratch']
  #allocation2 [shape = 'f32[8,256]{1,0:T(8,128)}', space=vmem, size = 0x2000, scoped, tag = 'scratch operand']
  #allocation3 [shape = 'f32[256,256]{1,0:T(8,128)}', space=vmem, size = 0x40000, scoped, tag = 'scratch operand']
  #allocation4 [shape = 'f32[1,32]{1,0:T(1,128)}', space=vmem, size = 0x200, scoped, tag = 'scratch operand']
  #allocation5 [shape = 'f32[1,32]{1,0:T(1,128)}', space=vmem, size = 0x200, scoped, tag = 'scratch operand']
  %s0 = inlined_call_operand.hbm [shape: f32[8,32], index: 0, kind: input, shape index: {}]
  %s1 = inlined_call_operand.hbm [shape: f32[8,32], index: 1, kind: input, shape index: {}]
  %s2 = inlined_call_operand.hbm [shape: f32[1,1], index: 2, kind: output, shape index: {}]
  %s3 = sld [smem:[#allocation0]]
  $region34: #{tpu_custom_call.1} parent=0
    _
  %s5 = ssub.s32 1, %s3
  %s6 = scalar_select 0, %s5, %s3
  $region1: #{tpu_custom_call.1} parent=0
    #allocation6 [shape = 'u8[4096]{0}', space=vmem, size = 0x1000, scoped, tag = 'input window, operand 0, single buffered']
    #allocation7 [shape = 's32[1]{0}', space=sflag, size = 0x4, scoped, tag = 'scoped memory for tpu_custom_call.1']
    #allocation8 [shape = 's32[1]{0}', space=sflag, size = 0x4, scoped, tag = 'scoped memory for tpu_custom_call.1']
    #allocation9 [shape = 'u8[4096]{0}', space=vmem, size = 0x1000, scoped, tag = 'input window, operand 1, single buffered']
    #allocation10 [shape = 's32[1]{0}', space=sflag, size = 0x4, scoped, tag = 'scoped memory for tpu_custom_call.1']
    #allocation11 [shape = 'u8[512]{0}', space=smem, size = 0x200, scoped, tag = 'output window, operand 0, single buffered']
    %7 = vsyncpa [#allocation7], 0
    %8 = vsyncpa [#allocation10], 0
    %9 = vsyncpa [#allocation8], 0
    // Predicated region
    $region2: #{tpu_custom_call.1} parent=1 // pred_check
      _
    $region3: #{tpu_custom_call.1} parent=1 // pred_check_branch
      %11 = sbr.rel (0) target = $region5
    $region4: #{tpu_custom_call.1} parent=1 // pred_region
      %13 = vsyncadd [#allocation7], 0
      %s15 = sshll.u32 %s0, 4
      %s16 = int_to_ptr.hbm [resolvable:$true] %s15
      %s17 = sshll.u32 [#allocation6], 4
      %s18 = int_to_ptr.vmem [resolvable:$true] %s17
      %20 = dma.hbm_to_vmem [thread:$0]  %s16, 128, %s18, [#allocation7]
    $region5: #{tpu_custom_call.1} parent=1 // pred_fallthru
      _
    // Predicated region
    $region6: #{tpu_custom_call.1} parent=1 // pred_check
      _
    $region7: #{tpu_custom_call.1} parent=1 // pred_check_branch
      %22 = sbr.rel (0) target = $region9
    $region8: #{tpu_custom_call.1} parent=1 // pred_region
      %24 = vsyncadd [#allocation10], 0
      %s26 = sshll.u32 %s1, 4
      %s27 = int_to_ptr.hbm [resolvable:$true] %s26
      %s28 = sshll.u32 [#allocation9], 4
      %s29 = int_to_ptr.vmem [resolvable:$true] %s28
      %31 = dma.hbm_to_vmem [thread:$0]  %s27, 128, %s29, [#allocation10]
    $region9: #{tpu_custom_call.1} parent=1 // pred_fallthru
      _
    // Predicated region
    $region10: #{tpu_custom_call.1} parent=1 // pred_check
      _
    $region11: #{tpu_custom_call.1} parent=1 // pred_check_branch
      %33 = sbr.rel (0) target = $region13
    $region12: #{tpu_custom_call.1} parent=1 // pred_region
      %35 = dma.done [#allocation7], 128
    $region13: #{tpu_custom_call.1} parent=1 // pred_fallthru
      _
    // Predicated region
    $region14: #{tpu_custom_call.1} parent=1 // pred_check
      _
    $region15: #{tpu_custom_call.1} parent=1 // pred_check_branch
      %37 = sbr.rel (0) target = $region17
    $region16: #{tpu_custom_call.1} parent=1 // pred_region
      %39 = dma.done [#allocation10], 128
    $region17: #{tpu_custom_call.1} parent=1 // pred_fallthru
      _
    %p40 = scmp.eq.s32.totalorder 0, 0
    // Predicated region
    $region18: #{tpu_custom_call.1} parent=1 // pred_check
      %p41 = pneg %p40
    $region19: #{tpu_custom_call.1} parent=1 // pred_check_branch
      %43 = sbr.rel (%p41) target = $region21
    $region20: #{tpu_custom_call.1} parent=1 // pred_region
      %44 = vst [vmem:[#allocation2] sm:$0xff] 0.0
      %45 = vst [vmem:[#allocation2 + $0x8] sm:$0xff] 0.0
      %46 = vst [vmem:[#allocation3] sm:$0xff] 0.0
      %47 = vst [vmem:[#allocation3 + $0x8] sm:$0xff] 0.0
      %48 = vst [vmem:[#allocation3 + $0x10] sm:$0xff] 0.0
      %49 = vst [vmem:[#allocation3 + $0x18] sm:$0xff] 0.0
      %50 = vst [vmem:[#allocation3 + $0x20] sm:$0xff] 0.0
      %51 = vst [vmem:[#allocation3 + $0x28] sm:$0xff] 0.0
      %52 = vst [vmem:[#allocation3 + $0x30] sm:$0xff] 0.0
      %53 = vst [vmem:[#allocation3 + $0x38] sm:$0xff] 0.0
      %54 = vst [vmem:[#allocation3 + $0x40] sm:$0xff] 0.0
      %55 = vst [vmem:[#allocation3 + $0x48] sm:$0xff] 0.0
      %56 = vst [vmem:[#allocation3 + $0x50] sm:$0xff] 0.0
      %57 = vst [vmem:[#allocation3 + $0x58] sm:$0xff] 0.0
      %58 = vst [vmem:[#allocation3 + $0x60] sm:$0xff] 0.0
      %59 = vst [vmem:[#allocation3 + $0x68] sm:$0xff] 0.0
      %60 = vst [vmem:[#allocation3 + $0x70] sm:$0xff] 0.0
      %61 = vst [vmem:[#allocation3 + $0x78] sm:$0xff] 0.0
      %62 = vst [vmem:[#allocation3 + $0x80] sm:$0xff] 0.0
      %63 = vst [vmem:[#allocation3 + $0x88] sm:$0xff] 0.0
      %64 = vst [vmem:[#allocation3 + $0x90] sm:$0xff] 0.0
      %65 = vst [vmem:[#allocation3 + $0x98] sm:$0xff] 0.0
      %66 = vst [vmem:[#allocation3 + $0xa0] sm:$0xff] 0.0
      %67 = vst [vmem:[#allocation3 + $0xa8] sm:$0xff] 0.0
      %68 = vst [vmem:[#allocation3 + $0xb0] sm:$0xff] 0.0
      %69 = vst [vmem:[#allocation3 + $0xb8] sm:$0xff] 0.0
      %70 = vst [vmem:[#allocation3 + $0xc0] sm:$0xff] 0.0
      %71 = vst [vmem:[#allocation3 + $0xc8] sm:$0xff] 0.0
      %72 = vst [vmem:[#allocation3 + $0xd0] sm:$0xff] 0.0
      %73 = vst [vmem:[#allocation3 + $0xd8] sm:$0xff] 0.0
      %74 = vst [vmem:[#allocation3 + $0xe0] sm:$0xff] 0.0
      %75 = vst [vmem:[#allocation3 + $0xe8] sm:$0xff] 0.0
      %76 = vst [vmem:[#allocation3 + $0xf0] sm:$0xff] 0.0
      %77 = vst [vmem:[#allocation3 + $0xf8] sm:$0xff] 0.0
      %78 = vst [vmem:[#allocation3 + $0x100] sm:$0xff] 0.0
      %79 = vst [vmem:[#allocation3 + $0x108] sm:$0xff] 0.0
      %80 = vst [vmem:[#allocation3 + $0x110] sm:$0xff] 0.0
      %81 = vst [vmem:[#allocation3 + $0x118] sm:$0xff] 0.0
      %82 = vst [vmem:[#allocation3 + $0x120] sm:$0xff] 0.0
      %83 = vst [vmem:[#allocation3 + $0x128] sm:$0xff] 0.0
      %84 = vst [vmem:[#allocation3 + $0x130] sm:$0xff] 0.0
      %85 = vst [vmem:[#allocation3 + $0x138] sm:$0xff] 0.0
      %86 = vst [vmem:[#allocation3 + $0x140] sm:$0xff] 0.0
      %87 = vst [vmem:[#allocation3 + $0x148] sm:$0xff] 0.0
      %88 = vst [vmem:[#allocation3 + $0x150] sm:$0xff] 0.0
      %89 = vst [vmem:[#allocation3 + $0x158] sm:$0xff] 0.0
      %90 = vst [vmem:[#allocation3 + $0x160] sm:$0xff] 0.0
      %91 = vst [vmem:[#allocation3 + $0x168] sm:$0xff] 0.0
      %92 = vst [vmem:[#allocation3 + $0x170] sm:$0xff] 0.0
      %93 = vst [vmem:[#allocation3 + $0x178] sm:$0xff] 0.0
      %94 = vst [vmem:[#allocation3 + $0x180] sm:$0xff] 0.0
      %95 = vst [vmem:[#allocation3 + $0x188] sm:$0xff] 0.0
      %96 = vst [vmem:[#allocation3 + $0x190] sm:$0xff] 0.0
      %97 = vst [vmem:[#allocation3 + $0x198] sm:$0xff] 0.0
      %98 = vst [vmem:[#allocation3 + $0x1a0] sm:$0xff] 0.0
      %99 = vst [vmem:[#allocation3 + $0x1a8] sm:$0xff] 0.0
      %100 = vst [vmem:[#allocation3 + $0x1b0] sm:$0xff] 0.0
      %101 = vst [vmem:[#allocation3 + $0x1b8] sm:$0xff] 0.0
      %102 = vst [vmem:[#allocation3 + $0x1c0] sm:$0xff] 0.0
      %103 = vst [vmem:[#allocation3 + $0x1c8] sm:$0xff] 0.0
      %104 = vst [vmem:[#allocation3 + $0x1d0] sm:$0xff] 0.0
      %105 = vst [vmem:[#allocation3 + $0x1d8] sm:$0xff] 0.0
      %106 = vst [vmem:[#allocation3 + $0x1e0] sm:$0xff] 0.0
      %107 = vst [vmem:[#allocation3 + $0x1e8] sm:$0xff] 0.0
      %108 = vst [vmem:[#allocation3 + $0x1f0] sm:$0xff] 0.0
      %109 = vst [vmem:[#allocation3 + $0x1f8] sm:$0xff] 0.0
      %vm110 = vcmask 253952
      %111 = vst.msk [vmem:[#allocation4] sm:$0x1] %vm110, 0.0
      %112 = vst.msk [vmem:[#allocation5] sm:$0x1] %vm110, 0.0
    $region21: #{tpu_custom_call.1} parent=1 // pred_fallthru
      _
    %v113 = vld [vmem:[#allocation6] sm:$0xff]
    %v114 = vld [vmem:[#allocation9] sm:$0xff]
    %vm115 = vcmask 261120
    %116 = vst.msk [vmem:[#allocation2] sm:$0xff] %vm115, %v113
    %117 = vst.msk [vmem:[#allocation2 + $0x8] sm:$0xff] %vm115, %v114
    %v118 = vld [vmem:[#allocation2] sm:$0xff]
    %v119 = vld [vmem:[#allocation2 + $0x8] sm:$0xff]
    %v120 = vld [vmem:[#allocation3] sm:$0xff]
    %v121 = vld [vmem:[#allocation3 + $0x8] sm:$0xff]
    %v122 = vld [vmem:[#allocation3 + $0x10] sm:$0xff]
    %v123 = vld [vmem:[#allocation3 + $0x18] sm:$0xff]
    %v124 = vld [vmem:[#allocation3 + $0x20] sm:$0xff]
    %v125 = vld [vmem:[#allocation3 + $0x28] sm:$0xff]
    %v126 = vld [vmem:[#allocation3 + $0x30] sm:$0xff]
    %v127 = vld [vmem:[#allocation3 + $0x38] sm:$0xff]
    %v128 = vld [vmem:[#allocation3 + $0x40] sm:$0xff]
    %v129 = vld [vmem:[#allocation3 + $0x48] sm:$0xff]
    %v130 = vld [vmem:[#allocation3 + $0x50] sm:$0xff]
    %v131 = vld [vmem:[#allocation3 + $0x58] sm:$0xff]
    %v132 = vld [vmem:[#allocation3 + $0x60] sm:$0xff]
    %v133 = vld [vmem:[#allocation3 + $0x68] sm:$0xff]
    %v134 = vld [vmem:[#allocation3 + $0x70] sm:$0xff]
    %v135 = vld [vmem:[#allocation3 + $0x78] sm:$0xff]
    %v136 = vld [vmem:[#allocation3 + $0x80] sm:$0xff]
    %v137 = vld [vmem:[#allocation3 + $0x88] sm:$0xff]
    %v138 = vld [vmem:[#allocation3 + $0x90] sm:$0xff]
    %v139 = vld [vmem:[#allocation3 + $0x98] sm:$0xff]
    %v140 = vld [vmem:[#allocation3 + $0xa0] sm:$0xff]
    %v141 = vld [vmem:[#allocation3 + $0xa8] sm:$0xff]
    %v142 = vld [vmem:[#allocation3 + $0xb0] sm:$0xff]
    %v143 = vld [vmem:[#allocation3 + $0xb8] sm:$0xff]
    %v144 = vld [vmem:[#allocation3 + $0xc0] sm:$0xff]
    %v145 = vld [vmem:[#allocation3 + $0xc8] sm:$0xff]
    %v146 = vld [vmem:[#allocation3 + $0xd0] sm:$0xff]
    %v147 = vld [vmem:[#allocation3 + $0xd8] sm:$0xff]
    %v148 = vld [vmem:[#allocation3 + $0xe0] sm:$0xff]
    %v149 = vld [vmem:[#allocation3 + $0xe8] sm:$0xff]
    %v150 = vld [vmem:[#allocation3 + $0xf0] sm:$0xff]
    %v151 = vld [vmem:[#allocation3 + $0xf8] sm:$0xff]
    %v152 = vld [vmem:[#allocation3 + $0x100] sm:$0xff]
    %v153 = vld [vmem:[#allocation3 + $0x108] sm:$0xff]
    %v154 = vld [vmem:[#allocation3 + $0x110] sm:$0xff]
    %v155 = vld [vmem:[#allocation3 + $0x118] sm:$0xff]
    %v156 = vld [vmem:[#allocation3 + $0x120] sm:$0xff]
    %v157 = vld [vmem:[#allocation3 + $0x128] sm:$0xff]
    %v158 = vld [vmem:[#allocation3 + $0x130] sm:$0xff]
    %v159 = vld [vmem:[#allocation3 + $0x138] sm:$0xff]
    %v160 = vld [vmem:[#allocation3 + $0x140] sm:$0xff]
    %v161 = vld [vmem:[#allocation3 + $0x148] sm:$0xff]
    %v162 = vld [vmem:[#allocation3 + $0x150] sm:$0xff]
    %v163 = vld [vmem:[#allocation3 + $0x158] sm:$0xff]
    %v164 = vld [vmem:[#allocation3 + $0x160] sm:$0xff]
    %v165 = vld [vmem:[#allocation3 + $0x168] sm:$0xff]
    %v166 = vld [vmem:[#allocation3 + $0x170] sm:$0xff]
    %v167 = vld [vmem:[#allocation3 + $0x178] sm:$0xff]
    %v168 = vld [vmem:[#allocation3 + $0x180] sm:$0xff]
    %v169 = vld [vmem:[#allocation3 + $0x188] sm:$0xff]
    %v170 = vld [vmem:[#allocation3 + $0x190] sm:$0xff]
    %v171 = vld [vmem:[#allocation3 + $0x198] sm:$0xff]
    %v172 = vld [vmem:[#allocation3 + $0x1a0] sm:$0xff]
    %v173 = vld [vmem:[#allocation3 + $0x1a8] sm:$0xff]
    %v174 = vld [vmem:[#allocation3 + $0x1b0] sm:$0xff]
    %v175 = vld [vmem:[#allocation3 + $0x1b8] sm:$0xff]
    %v176 = vld [vmem:[#allocation3 + $0x1c0] sm:$0xff]
    %v177 = vld [vmem:[#allocation3 + $0x1c8] sm:$0xff]
    %v178 = vld [vmem:[#allocation3 + $0x1d0] sm:$0xff]
    %v179 = vld [vmem:[#allocation3 + $0x1d8] sm:$0xff]
    %v180 = vld [vmem:[#allocation3 + $0x1e0] sm:$0xff]
    %v181 = vld [vmem:[#allocation3 + $0x1e8] sm:$0xff]
    %v182 = vld [vmem:[#allocation3 + $0x1f0] sm:$0xff]
    %v183 = vld [vmem:[#allocation3 + $0x1f8] sm:$0xff]
    %184 = vxpose.xlu0.b32.start [1/16] %v118, 128
    %185 = vxpose.xlu0.b32.cont [2/16] 0.0, 128
    %186 = vxpose.xlu0.b32.cont [3/16] 0.0, 128
    %187 = vxpose.xlu0.b32.cont [4/16] 0.0, 128
    %188 = vxpose.xlu0.b32.cont [5/16] 0.0, 128
    %189 = vxpose.xlu0.b32.cont [6/16] 0.0, 128
    %190 = vxpose.xlu0.b32.cont [7/16] 0.0, 128
    %191 = vxpose.xlu0.b32.cont [8/16] 0.0, 128
    %192 = vxpose.xlu0.b32.cont [9/16] 0.0, 128
    %193 = vxpose.xlu0.b32.cont [10/16] 0.0, 128
    %194 = vxpose.xlu0.b32.cont [11/16] 0.0, 128
    %195 = vxpose.xlu0.b32.cont [12/16] 0.0, 128
    %196 = vxpose.xlu0.b32.cont [13/16] 0.0, 128
    %197 = vxpose.xlu0.b32.cont [14/16] 0.0, 128
    %198 = vxpose.xlu0.b32.cont [15/16] 0.0, 128
    %199 = vxpose.xlu0.b32.end [16/16] 0.0, 128
    %v200 = vpop.trf.xlu0
    %v201 = vpop.trf.xlu0
    %v202 = vpop.trf.xlu0
    %v203 = vpop.trf.xlu0
    %v204 = vpop.trf.xlu0
    %v205 = vpop.trf.xlu0
    %v206 = vpop.trf.xlu0
    %v207 = vpop.trf.xlu0
    %v208 = vpop.trf.xlu0
    %v209 = vpop.trf.xlu0
    %v210 = vpop.trf.xlu0
    %v211 = vpop.trf.xlu0
    %v212 = vpop.trf.xlu0
    %v213 = vpop.trf.xlu0
    %v214 = vpop.trf.xlu0
    %v215 = vpop.trf.xlu0
    %216 = vxpose.xlu0.b32.start [1/16] %v119, 128
    %217 = vxpose.xlu0.b32.cont [2/16] 0.0, 128
    %218 = vxpose.xlu0.b32.cont [3/16] 0.0, 128
    %219 = vxpose.xlu0.b32.cont [4/16] 0.0, 128
    %220 = vxpose.xlu0.b32.cont [5/16] 0.0, 128
    %221 = vxpose.xlu0.b32.cont [6/16] 0.0, 128
    %222 = vxpose.xlu0.b32.cont [7/16] 0.0, 128
    %223 = vxpose.xlu0.b32.cont [8/16] 0.0, 128
    %224 = vxpose.xlu0.b32.cont [9/16] 0.0, 128
    %225 = vxpose.xlu0.b32.cont [10/16] 0.0, 128
    %226 = vxpose.xlu0.b32.cont [11/16] 0.0, 128
    %227 = vxpose.xlu0.b32.cont [12/16] 0.0, 128
    %228 = vxpose.xlu0.b32.cont [13/16] 0.0, 128
    %229 = vxpose.xlu0.b32.cont [14/16] 0.0, 128
    %230 = vxpose.xlu0.b32.cont [15/16] 0.0, 128
    %231 = vxpose.xlu0.b32.end [16/16] 0.0, 128
    %v232 = vpop.trf.xlu0
    %v233 = vpop.trf.xlu0
    %v234 = vpop.trf.xlu0
    %v235 = vpop.trf.xlu0
    %v236 = vpop.trf.xlu0
    %v237 = vpop.trf.xlu0
    %v238 = vpop.trf.xlu0
    %v239 = vpop.trf.xlu0
    %v240 = vpop.trf.xlu0
    %v241 = vpop.trf.xlu0
    %v242 = vpop.trf.xlu0
    %v243 = vpop.trf.xlu0
    %v244 = vpop.trf.xlu0
    %v245 = vpop.trf.xlu0
    %v246 = vpop.trf.xlu0
    %v247 = vpop.trf.xlu0
    %vm248 = vcmask 64512
    %v250 = vsel %vm248, %v200, 0
    %v253 = vsel %vm248, %v201, 0
    %v256 = vsel %vm248, %v202, 0
    %v259 = vsel %vm248, %v203, 0
    %v262 = vsel %vm248, %v204, 0
    %v265 = vsel %vm248, %v205, 0
    %v268 = vsel %vm248, %v206, 0
    %v271 = vsel %vm248, %v207, 0
    %v274 = vsel %vm248, %v208, 0
    %v277 = vsel %vm248, %v209, 0
    %v280 = vsel %vm248, %v210, 0
    %v283 = vsel %vm248, %v211, 0
    %v286 = vsel %vm248, %v212, 0
    %v289 = vsel %vm248, %v213, 0
    %v292 = vsel %vm248, %v214, 0
    %v295 = vsel %vm248, %v215, 0
    %v298 = vsel %vm248, %v232, 0
    %v301 = vsel %vm248, %v233, 0
    %v304 = vsel %vm248, %v234, 0
    %v307 = vsel %vm248, %v235, 0
    %v310 = vsel %vm248, %v236, 0
    %v313 = vsel %vm248, %v237, 0
    %v316 = vsel %vm248, %v238, 0
    %v319 = vsel %vm248, %v239, 0
    %v322 = vsel %vm248, %v240, 0
    %v325 = vsel %vm248, %v241, 0
    %v328 = vsel %vm248, %v242, 0
    %v331 = vsel %vm248, %v243, 0
    %v334 = vsel %vm248, %v244, 0
    %v337 = vsel %vm248, %v245, 0
    %v340 = vsel %vm248, %v246, 0
    %v343 = vsel %vm248, %v247, 0
    %345 = vmatpush.msra.mxu0 0.0
    %346 = vmatpush.msra.mxu0 0.0
    %347 = vmatpush.msra.mxu0 0.0
    %348 = vmatpush.msra.mxu0 0.0
    %349 = vmatpush.msra.mxu0 0.0
    %350 = vmatpush.msra.mxu0 0.0
    %351 = vmatpush.msra.mxu0 0.0
    %352 = vmatpush.msra.mxu0 0.0
    %353 = vmatpush.msra.mxu0 0.0
    %354 = vmatpush.msra.mxu0 0.0
    %355 = vmatpush.msra.mxu0 0.0
    %356 = vmatpush.msra.mxu0 0.0
    %357 = vmatpush.msra.mxu0 0.0
    %358 = vmatpush.msra.mxu0 0.0
    %359 = vmatpush.msra.mxu0 0.0
    %360 = vmatpush.msra.mxu0 %v118
    %361 = vmatmul.f32.gmra.mxu0 %v250
    %v362 = vpop.f32.mrf.mxu0
    %v363 = vadd.f32 0.0, %v362
    %364 = vmatmul.f32.gmra.mxu0 %v253
    %v365 = vpop.f32.mrf.mxu0
    %v366 = vadd.f32 0.0, %v365
    %367 = vmatmul.f32.gmra.mxu0 %v256
    %v368 = vpop.f32.mrf.mxu0
    %v369 = vadd.f32 0.0, %v368
    %370 = vmatmul.f32.gmra.mxu0 %v259
    %v371 = vpop.f32.mrf.mxu0
    %v372 = vadd.f32 0.0, %v371
    %373 = vmatmul.f32.gmra.mxu0 %v262
    %v374 = vpop.f32.mrf.mxu0
    %v375 = vadd.f32 0.0, %v374
    %376 = vmatmul.f32.gmra.mxu0 %v265
    %v377 = vpop.f32.mrf.mxu0
    %v378 = vadd.f32 0.0, %v377
    %379 = vmatmul.f32.gmra.mxu0 %v268
    %v380 = vpop.f32.mrf.mxu0
    %v381 = vadd.f32 0.0, %v380
    %382 = vmatmul.f32.gmra.mxu0 %v271
    %v383 = vpop.f32.mrf.mxu0
    %v384 = vadd.f32 0.0, %v383
    %385 = vmatmul.f32.gmra.mxu0 %v274
    %v386 = vpop.f32.mrf.mxu0
    %v387 = vadd.f32 0.0, %v386
    %388 = vmatmul.f32.gmra.mxu0 %v277
    %v389 = vpop.f32.mrf.mxu0
    %v390 = vadd.f32 0.0, %v389
    %391 = vmatmul.f32.gmra.mxu0 %v280
    %v392 = vpop.f32.mrf.mxu0
    %v393 = vadd.f32 0.0, %v392
    %394 = vmatmul.f32.gmra.mxu0 %v283
    %v395 = vpop.f32.mrf.mxu0
    %v396 = vadd.f32 0.0, %v395
    %397 = vmatmul.f32.gmra.mxu0 %v286
    %v398 = vpop.f32.mrf.mxu0
    %v399 = vadd.f32 0.0, %v398
    %400 = vmatmul.f32.gmra.mxu0 %v289
    %v401 = vpop.f32.mrf.mxu0
    %v402 = vadd.f32 0.0, %v401
    %403 = vmatmul.f32.gmra.mxu0 %v292
    %v404 = vpop.f32.mrf.mxu0
    %v405 = vadd.f32 0.0, %v404
    %406 = vmatmul.f32.gmra.mxu0 %v295
    %v407 = vpop.f32.mrf.mxu0
    %v408 = vadd.f32 0.0, %v407
    %409 = vmatmul.f32.gmra.mxu0 %v298
    %v410 = vpop.f32.mrf.mxu0
    %v411 = vadd.f32 0.0, %v410
    %412 = vmatmul.f32.gmra.mxu0 %v301
    %v413 = vpop.f32.mrf.mxu0
    %v414 = vadd.f32 0.0, %v413
    %415 = vmatmul.f32.gmra.mxu0 %v304
    %v416 = vpop.f32.mrf.mxu0
    %v417 = vadd.f32 0.0, %v416
    %418 = vmatmul.f32.gmra.mxu0 %v307
    %v419 = vpop.f32.mrf.mxu0
    %v420 = vadd.f32 0.0, %v419
    %421 = vmatmul.f32.gmra.mxu0 %v310
    %v422 = vpop.f32.mrf.mxu0
    %v423 = vadd.f32 0.0, %v422
    %424 = vmatmul.f32.gmra.mxu0 %v313
    %v425 = vpop.f32.mrf.mxu0
    %v426 = vadd.f32 0.0, %v425
    %427 = vmatmul.f32.gmra.mxu0 %v316
    %v428 = vpop.f32.mrf.mxu0
    %v429 = vadd.f32 0.0, %v428
    %430 = vmatmul.f32.gmra.mxu0 %v319
    %v431 = vpop.f32.mrf.mxu0
    %v432 = vadd.f32 0.0, %v431
    %433 = vmatmul.f32.gmra.mxu0 %v322
    %v434 = vpop.f32.mrf.mxu0
    %v435 = vadd.f32 0.0, %v434
    %436 = vmatmul.f32.gmra.mxu0 %v325
    %v437 = vpop.f32.mrf.mxu0
    %v438 = vadd.f32 0.0, %v437
    %439 = vmatmul.f32.gmra.mxu0 %v328
    %v440 = vpop.f32.mrf.mxu0
    %v441 = vadd.f32 0.0, %v440
    %442 = vmatmul.f32.gmra.mxu0 %v331
    %v443 = vpop.f32.mrf.mxu0
    %v444 = vadd.f32 0.0, %v443
    %445 = vmatmul.f32.gmra.mxu0 %v334
    %v446 = vpop.f32.mrf.mxu0
    %v447 = vadd.f32 0.0, %v446
    %448 = vmatmul.f32.gmra.mxu0 %v337
    %v449 = vpop.f32.mrf.mxu0
    %v450 = vadd.f32 0.0, %v449
    %451 = vmatmul.f32.gmra.mxu0 %v340
    %v452 = vpop.f32.mrf.mxu0
    %v453 = vadd.f32 0.0, %v452
    %454 = vmatmul.f32.gmra.mxu0 %v343
    %v455 = vpop.f32.mrf.mxu0
    %v456 = vadd.f32 0.0, %v455
    %457 = vdwg.mxu0
    %458 = vmatpush.msra.mxu0 0.0
    %459 = vmatpush.msra.mxu0 0.0
    %460 = vmatpush.msra.mxu0 0.0
    %461 = vmatpush.msra.mxu0 0.0
    %462 = vmatpush.msra.mxu0 0.0
    %463 = vmatpush.msra.mxu0 0.0
    %464 = vmatpush.msra.mxu0 0.0
    %465 = vmatpush.msra.mxu0 0.0
    %466 = vmatpush.msra.mxu0 0.0
    %467 = vmatpush.msra.mxu0 0.0
    %468 = vmatpush.msra.mxu0 0.0
    %469 = vmatpush.msra.mxu0 0.0
    %470 = vmatpush.msra.mxu0 0.0
    %471 = vmatpush.msra.mxu0 0.0
    %472 = vmatpush.msra.mxu0 0.0
    %473 = vmatpush.msra.mxu0 %v119
    %474 = vmatmul.f32.gmra.mxu0 %v250
    %v475 = vpop.f32.mrf.mxu0
    %v476 = vadd.f32 0.0, %v475
    %477 = vmatmul.f32.gmra.mxu0 %v253
    %v478 = vpop.f32.mrf.mxu0
    %v479 = vadd.f32 0.0, %v478
    %480 = vmatmul.f32.gmra.mxu0 %v256
    %v481 = vpop.f32.mrf.mxu0
    %v482 = vadd.f32 0.0, %v481
    %483 = vmatmul.f32.gmra.mxu0 %v259
    %v484 = vpop.f32.mrf.mxu0
    %v485 = vadd.f32 0.0, %v484
    %486 = vmatmul.f32.gmra.mxu0 %v262
    %v487 = vpop.f32.mrf.mxu0
    %v488 = vadd.f32 0.0, %v487
    %489 = vmatmul.f32.gmra.mxu0 %v265
    %v490 = vpop.f32.mrf.mxu0
    %v491 = vadd.f32 0.0, %v490
    %492 = vmatmul.f32.gmra.mxu0 %v268
    %v493 = vpop.f32.mrf.mxu0
    %v494 = vadd.f32 0.0, %v493
    %495 = vmatmul.f32.gmra.mxu0 %v271
    %v496 = vpop.f32.mrf.mxu0
    %v497 = vadd.f32 0.0, %v496
    %498 = vmatmul.f32.gmra.mxu0 %v274
    %v499 = vpop.f32.mrf.mxu0
    %v500 = vadd.f32 0.0, %v499
    %501 = vmatmul.f32.gmra.mxu0 %v277
    %v502 = vpop.f32.mrf.mxu0
    %v503 = vadd.f32 0.0, %v502
    %504 = vmatmul.f32.gmra.mxu0 %v280
    %v505 = vpop.f32.mrf.mxu0
    %v506 = vadd.f32 0.0, %v505
    %507 = vmatmul.f32.gmra.mxu0 %v283
    %v508 = vpop.f32.mrf.mxu0
    %v509 = vadd.f32 0.0, %v508
    %510 = vmatmul.f32.gmra.mxu0 %v286
    %v511 = vpop.f32.mrf.mxu0
    %v512 = vadd.f32 0.0, %v511
    %513 = vmatmul.f32.gmra.mxu0 %v289
    %v514 = vpop.f32.mrf.mxu0
    %v515 = vadd.f32 0.0, %v514
    %516 = vmatmul.f32.gmra.mxu0 %v292
    %v517 = vpop.f32.mrf.mxu0
    %v518 = vadd.f32 0.0, %v517
    %519 = vmatmul.f32.gmra.mxu0 %v295
    %v520 = vpop.f32.mrf.mxu0
    %v521 = vadd.f32 0.0, %v520
    %522 = vmatmul.f32.gmra.mxu0 %v298
    %v523 = vpop.f32.mrf.mxu0
    %v524 = vadd.f32 0.0, %v523
    %525 = vmatmul.f32.gmra.mxu0 %v301
    %v526 = vpop.f32.mrf.mxu0
    %v527 = vadd.f32 0.0, %v526
    %528 = vmatmul.f32.gmra.mxu0 %v304
    %v529 = vpop.f32.mrf.mxu0
    %v530 = vadd.f32 0.0, %v529
    %531 = vmatmul.f32.gmra.mxu0 %v307
    %v532 = vpop.f32.mrf.mxu0
    %v533 = vadd.f32 0.0, %v532
    %534 = vmatmul.f32.gmra.mxu0 %v310
    %v535 = vpop.f32.mrf.mxu0
    %v536 = vadd.f32 0.0, %v535
    %537 = vmatmul.f32.gmra.mxu0 %v313
    %v538 = vpop.f32.mrf.mxu0
    %v539 = vadd.f32 0.0, %v538
    %540 = vmatmul.f32.gmra.mxu0 %v316
    %v541 = vpop.f32.mrf.mxu0
    %v542 = vadd.f32 0.0, %v541
    %543 = vmatmul.f32.gmra.mxu0 %v319
    %v544 = vpop.f32.mrf.mxu0
    %v545 = vadd.f32 0.0, %v544
    %546 = vmatmul.f32.gmra.mxu0 %v322
    %v547 = vpop.f32.mrf.mxu0
    %v548 = vadd.f32 0.0, %v547
    %549 = vmatmul.f32.gmra.mxu0 %v325
    %v550 = vpop.f32.mrf.mxu0
    %v551 = vadd.f32 0.0, %v550
    %552 = vmatmul.f32.gmra.mxu0 %v328
    %v553 = vpop.f32.mrf.mxu0
    %v554 = vadd.f32 0.0, %v553
    %555 = vmatmul.f32.gmra.mxu0 %v331
    %v556 = vpop.f32.mrf.mxu0
    %v557 = vadd.f32 0.0, %v556
    %558 = vmatmul.f32.gmra.mxu0 %v334
    %v559 = vpop.f32.mrf.mxu0
    %v560 = vadd.f32 0.0, %v559
    %561 = vmatmul.f32.gmra.mxu0 %v337
    %v562 = vpop.f32.mrf.mxu0
    %v563 = vadd.f32 0.0, %v562
    %564 = vmatmul.f32.gmra.mxu0 %v340
    %v565 = vpop.f32.mrf.mxu0
    %v566 = vadd.f32 0.0, %v565
    %567 = vmatmul.f32.gmra.mxu0 %v343
    %v568 = vpop.f32.mrf.mxu0
    %v569 = vadd.f32 0.0, %v568
    %570 = vdwg.mxu0
    %v571 = vadd.f32 %v120, %v363
    %v572 = vadd.f32 %v121, %v476
    %v573 = vadd.f32 %v122, %v366
    %v574 = vadd.f32 %v123, %v479
    %v575 = vadd.f32 %v124, %v369
    %v576 = vadd.f32 %v125, %v482
    %v577 = vadd.f32 %v126, %v372
    %v578 = vadd.f32 %v127, %v485
    %v579 = vadd.f32 %v128, %v375
    %v580 = vadd.f32 %v129, %v488
    %v581 = vadd.f32 %v130, %v378
    %v582 = vadd.f32 %v131, %v491
    %v583 = vadd.f32 %v132, %v381
    %v584 = vadd.f32 %v133, %v494
    %v585 = vadd.f32 %v134, %v384
    %v586 = vadd.f32 %v135, %v497
    %v587 = vadd.f32 %v136, %v387
    %v588 = vadd.f32 %v137, %v500
    %v589 = vadd.f32 %v138, %v390
    %v590 = vadd.f32 %v139, %v503
    %v591 = vadd.f32 %v140, %v393
    %v592 = vadd.f32 %v141, %v506
    %v593 = vadd.f32 %v142, %v396
    %v594 = vadd.f32 %v143, %v509
    %v595 = vadd.f32 %v144, %v399
    %v596 = vadd.f32 %v145, %v512
    %v597 = vadd.f32 %v146, %v402
    %v598 = vadd.f32 %v147, %v515
    %v599 = vadd.f32 %v148, %v405
    %v600 = vadd.f32 %v149, %v518
    %v601 = vadd.f32 %v150, %v408
    %v602 = vadd.f32 %v151, %v521
    %v603 = vadd.f32 %v152, %v411
    %v604 = vadd.f32 %v153, %v524
    %v605 = vadd.f32 %v154, %v414
    %v606 = vadd.f32 %v155, %v527
    %v607 = vadd.f32 %v156, %v417
    %v608 = vadd.f32 %v157, %v530
    %v609 = vadd.f32 %v158, %v420
    %v610 = vadd.f32 %v159, %v533
    %v611 = vadd.f32 %v160, %v423
    %v612 = vadd.f32 %v161, %v536
    %v613 = vadd.f32 %v162, %v426
    %v614 = vadd.f32 %v163, %v539
    %v615 = vadd.f32 %v164, %v429
    %v616 = vadd.f32 %v165, %v542
    %v617 = vadd.f32 %v166, %v432
    %v618 = vadd.f32 %v167, %v545
    %v619 = vadd.f32 %v168, %v435
    %v620 = vadd.f32 %v169, %v548
    %v621 = vadd.f32 %v170, %v438
    %v622 = vadd.f32 %v171, %v551
    %v623 = vadd.f32 %v172, %v441
    %v624 = vadd.f32 %v173, %v554
    %v625 = vadd.f32 %v174, %v444
    %v626 = vadd.f32 %v175, %v557
    %v627 = vadd.f32 %v176, %v447
    %v628 = vadd.f32 %v177, %v560
    %v629 = vadd.f32 %v178, %v450
    %v630 = vadd.f32 %v179, %v563
    %v631 = vadd.f32 %v180, %v453
    %v632 = vadd.f32 %v181, %v566
    %v633 = vadd.f32 %v182, %v456
    %v634 = vadd.f32 %v183, %v569
    %635 = vst [vmem:[#allocation3] sm:$0xff] %v571
    %636 = vst [vmem:[#allocation3 + $0x8] sm:$0xff] %v572
    %637 = vst [vmem:[#allocation3 + $0x10] sm:$0xff] %v573
    %638 = vst [vmem:[#allocation3 + $0x18] sm:$0xff] %v574
    %639 = vst [vmem:[#allocation3 + $0x20] sm:$0xff] %v575
    %640 = vst [vmem:[#allocation3 + $0x28] sm:$0xff] %v576
    %641 = vst [vmem:[#allocation3 + $0x30] sm:$0xff] %v577
    %642 = vst [vmem:[#allocation3 + $0x38] sm:$0xff] %v578
    %643 = vst [vmem:[#allocation3 + $0x40] sm:$0xff] %v579
    %644 = vst [vmem:[#allocation3 + $0x48] sm:$0xff] %v580
    %645 = vst [vmem:[#allocation3 + $0x50] sm:$0xff] %v581
    %646 = vst [vmem:[#allocation3 + $0x58] sm:$0xff] %v582
    %647 = vst [vmem:[#allocation3 + $0x60] sm:$0xff] %v583
    %648 = vst [vmem:[#allocation3 + $0x68] sm:$0xff] %v584
    %649 = vst [vmem:[#allocation3 + $0x70] sm:$0xff] %v585
    %650 = vst [vmem:[#allocation3 + $0x78] sm:$0xff] %v586
    %651 = vst [vmem:[#allocation3 + $0x80] sm:$0xff] %v587
    %652 = vst [vmem:[#allocation3 + $0x88] sm:$0xff] %v588
    %653 = vst [vmem:[#allocation3 + $0x90] sm:$0xff] %v589
    %654 = vst [vmem:[#allocation3 + $0x98] sm:$0xff] %v590
    %655 = vst [vmem:[#allocation3 + $0xa0] sm:$0xff] %v591
    %656 = vst [vmem:[#allocation3 + $0xa8] sm:$0xff] %v592
    %657 = vst [vmem:[#allocation3 + $0xb0] sm:$0xff] %v593
    %658 = vst [vmem:[#allocation3 + $0xb8] sm:$0xff] %v594
    %659 = vst [vmem:[#allocation3 + $0xc0] sm:$0xff] %v595
    %660 = vst [vmem:[#allocation3 + $0xc8] sm:$0xff] %v596
    %661 = vst [vmem:[#allocation3 + $0xd0] sm:$0xff] %v597
    %662 = vst [vmem:[#allocation3 + $0xd8] sm:$0xff] %v598
    %663 = vst [vmem:[#allocation3 + $0xe0] sm:$0xff] %v599
    %664 = vst [vmem:[#allocation3 + $0xe8] sm:$0xff] %v600
    %665 = vst [vmem:[#allocation3 + $0xf0] sm:$0xff] %v601
    %666 = vst [vmem:[#allocation3 + $0xf8] sm:$0xff] %v602
    %667 = vst [vmem:[#allocation3 + $0x100] sm:$0xff] %v603
    %668 = vst [vmem:[#allocation3 + $0x108] sm:$0xff] %v604
    %669 = vst [vmem:[#allocation3 + $0x110] sm:$0xff] %v605
    %670 = vst [vmem:[#allocation3 + $0x118] sm:$0xff] %v606
    %671 = vst [vmem:[#allocation3 + $0x120] sm:$0xff] %v607
    %672 = vst [vmem:[#allocation3 + $0x128] sm:$0xff] %v608
    %673 = vst [vmem:[#allocation3 + $0x130] sm:$0xff] %v609
    %674 = vst [vmem:[#allocation3 + $0x138] sm:$0xff] %v610
    %675 = vst [vmem:[#allocation3 + $0x140] sm:$0xff] %v611
    %676 = vst [vmem:[#allocation3 + $0x148] sm:$0xff] %v612
    %677 = vst [vmem:[#allocation3 + $0x150] sm:$0xff] %v613
    %678 = vst [vmem:[#allocation3 + $0x158] sm:$0xff] %v614
    %679 = vst [vmem:[#allocation3 + $0x160] sm:$0xff] %v615
    %680 = vst [vmem:[#allocation3 + $0x168] sm:$0xff] %v616
    %681 = vst [vmem:[#allocation3 + $0x170] sm:$0xff] %v617
    %682 = vst [vmem:[#allocation3 + $0x178] sm:$0xff] %v618
    %683 = vst [vmem:[#allocation3 + $0x180] sm:$0xff] %v619
    %684 = vst [vmem:[#allocation3 + $0x188] sm:$0xff] %v620
    %685 = vst [vmem:[#allocation3 + $0x190] sm:$0xff] %v621
    %686 = vst [vmem:[#allocation3 + $0x198] sm:$0xff] %v622
    %687 = vst [vmem:[#allocation3 + $0x1a0] sm:$0xff] %v623
    %688 = vst [vmem:[#allocation3 + $0x1a8] sm:$0xff] %v624
    %689 = vst [vmem:[#allocation3 + $0x1b0] sm:$0xff] %v625
    %690 = vst [vmem:[#allocation3 + $0x1b8] sm:$0xff] %v626
    %691 = vst [vmem:[#allocation3 + $0x1c0] sm:$0xff] %v627
    %692 = vst [vmem:[#allocation3 + $0x1c8] sm:$0xff] %v628
    %693 = vst [vmem:[#allocation3 + $0x1d0] sm:$0xff] %v629
    %694 = vst [vmem:[#allocation3 + $0x1d8] sm:$0xff] %v630
    %695 = vst [vmem:[#allocation3 + $0x1e0] sm:$0xff] %v631
    %696 = vst [vmem:[#allocation3 + $0x1e8] sm:$0xff] %v632
    %697 = vst [vmem:[#allocation3 + $0x1f0] sm:$0xff] %v633
    %698 = vst [vmem:[#allocation3 + $0x1f8] sm:$0xff] %v634
    %v699 = vld [vmem:[#allocation4] sm:$0x1]
    %v700 = vsel %vm115, %v113, 0.0
    %v701 = vrot.slane %v700, 4
    %v702 = vadd.f32 %v700, %v701
    %v703 = vrot.slane %v702, 2
    %v704 = vadd.f32 %v702, %v703
    %v705 = vrot.slane %v704, 1
    %v706 = vadd.f32 %v704, %v705
    %v707 = vadd.f32 %v699, %v706
    %vm708 = vcmask 253952
    %709 = vst.msk [vmem:[#allocation4] sm:$0x1] %vm708, %v707
    %v710 = vld [vmem:[#allocation5] sm:$0x1]
    %v711 = vsel %vm115, %v114, 0.0
    %v712 = vrot.slane %v711, 4
    %v713 = vadd.f32 %v711, %v712
    %v714 = vrot.slane %v713, 2
    %v715 = vadd.f32 %v713, %v714
    %v716 = vrot.slane %v715, 1
    %v717 = vadd.f32 %v715, %v716
    %v718 = vadd.f32 %v710, %v717
    %719 = vst.msk [vmem:[#allocation5] sm:$0x1] %vm708, %v718
    // Predicated region
    $region22: #{tpu_custom_call.1} parent=1 // pred_check
      %p720 = pneg %p40
    $region23: #{tpu_custom_call.1} parent=1 // pred_check_branch
      %722 = sbr.rel (%p720) target = $region25
    $region24: #{tpu_custom_call.1} parent=1 // pred_region
      %v723 = vlaneseq
      %v724 = vshrl.u32 %v723, 7
      %v725 = vadd.s32 %v724, 8
      %v726 = vadd.s32 %v724, 16
      %v727 = vadd.s32 %v724, 24
      %v728 = vlaneseq
      %v729 = vand.u32 %v728, 127
      %vm730 = vcmp.eq.s32.totalorder %v724, %v729
      %vm731 = vcmp.eq.s32.totalorder %v725, %v729
      %vm732 = vcmp.eq.s32.totalorder %v726, %v729
      %vm733 = vcmp.eq.s32.totalorder %v727, %v729
      %v734 = vsel %vm730, 1, 0
      %v735 = vsel %vm731, 1, 0
      %v736 = vsel %vm732, 1, 0
      %v737 = vsel %vm733, 1, 0
      %v738 = vcvt.s32.f32 %v734
      %v739 = vcvt.s32.f32 %v735
      %v740 = vcvt.s32.f32 %v736
      %v741 = vcvt.s32.f32 %v737
      %v742 = vld [vmem:[#allocation3] sm:$0xff]
      %v743 = vld [vmem:[#allocation3 + $0x10] sm:$0xff]
      %v744 = vld [vmem:[#allocation3 + $0x20] sm:$0xff]
      %v745 = vld [vmem:[#allocation3 + $0x30] sm:$0xff]
      %v746 = vld [vmem:[#allocation3 + $0x108] sm:$0xff]
      %v747 = vld [vmem:[#allocation3 + $0x118] sm:$0xff]
      %v748 = vld [vmem:[#allocation3 + $0x128] sm:$0xff]
      %v749 = vld [vmem:[#allocation3 + $0x138] sm:$0xff]
      %v750 = vld [vmem:[#allocation3 + $0x8] sm:$0xff]
      %v751 = vld [vmem:[#allocation3 + $0x18] sm:$0xff]
      %v752 = vld [vmem:[#allocation3 + $0x28] sm:$0xff]
      %v753 = vld [vmem:[#allocation3 + $0x38] sm:$0xff]
      %v754 = vmul.f32 %v750, %v738
      %v755 = vmul.f32 %v751, %v739
      %v756 = vmul.f32 %v752, %v740
      %v757 = vmul.f32 %v753, %v741
      %v758 = vsel %vm115, %v754, 0.0
      %v759 = vsel %vm115, %v755, 0.0
      %v760 = vadd.f32 %v758, %v759
      %v761 = vsel %vm115, %v756, 0.0
      %v762 = vadd.f32 %v760, %v761
      %v763 = vsel %vm115, %v757, 0.0
      %v764 = vadd.f32 %v762, %v763
      %v765 = vrot.slane %v764, 4
      %v766 = vadd.f32 %v764, %v765
      %v767 = vrot.slane %v766, 2
      %v768 = vadd.f32 %v766, %v767
      %v769 = vrot.slane %v768, 1
      %v770 = vadd.f32 %v768, %v769
      %v771 = vld [vmem:[#allocation4] sm:$0x1]
      %v772 = vld [vmem:[#allocation5] sm:$0x1]
      %v773 = vmul.f32 %v771, 0.125
      %v774 = vmul.f32 %v772, 0.125
      %v775 = vmul.f32 %v742, %v738
      %v776 = vmul.f32 %v743, %v739
      %v777 = vmul.f32 %v744, %v740
      %v778 = vmul.f32 %v745, %v741
      %v779 = vsel %vm115, %v775, 0.0
      %v780 = vsel %vm115, %v776, 0.0
      %v781 = vadd.f32 %v779, %v780
      %v782 = vsel %vm115, %v777, 0.0
      %v783 = vadd.f32 %v781, %v782
      %v784 = vsel %vm115, %v778, 0.0
      %v785 = vadd.f32 %v783, %v784
      %v786 = vrot.slane %v785, 4
      %v787 = vadd.f32 %v785, %v786
      %v788 = vrot.slane %v787, 2
      %v789 = vadd.f32 %v787, %v788
      %v790 = vrot.slane %v789, 1
      %v791 = vadd.f32 %v789, %v790
      %v792 = vmul.f32 %v746, %v738
      %v793 = vmul.f32 %v747, %v739
      %v794 = vmul.f32 %v748, %v740
      %v795 = vmul.f32 %v749, %v741
      %v796 = vsel %vm115, %v792, 0.0
      %v797 = vsel %vm115, %v793, 0.0
      %v798 = vadd.f32 %v796, %v797
      %v799 = vsel %vm115, %v794, 0.0
      %v800 = vadd.f32 %v798, %v799
      %v801 = vsel %vm115, %v795, 0.0
      %v802 = vadd.f32 %v800, %v801
      %v803 = vrot.slane %v802, 4
      %v804 = vadd.f32 %v802, %v803
      %v805 = vrot.slane %v804, 2
      %v806 = vadd.f32 %v804, %v805
      %v807 = vrot.slane %v806, 1
      %v808 = vadd.f32 %v806, %v807
      %v809 = vmul.f32 %v773, 8.0
      %v810 = vmul.f32 %v809, %v773
      %v811 = vsub.f32 %v791, %v810
      %v812 = vmul.f32 %v811, 0.14285715
      %v813 = vmul.f32 %v774, 8.0
      %v814 = vmul.f32 %v813, %v774
      %v815 = vsub.f32 %v808, %v814
      %v816 = vmul.f32 %v815, 0.14285715
      %v817 = vrsqrt.pop %v812
      %v818 = vmul.f32 %v817, %v812
      %v819 = vmul.f32 %v818, %v817
      %v820 = vmul.f32 0.5, %v819
      %v821 = vsub.f32 1.5, %v820
      %v822 = vmul.f32 %v817, %v821
      %vm823 = vweird.f32 %v812
      %vm824 = vweird.f32 %v817
      %vm825 = vmor %vm823, %vm824
      %v826 = vsel %vm825, %v817, %v822
      %v827 = vrsqrt.pop %v816
      %v828 = vmul.f32 %v827, %v816
      %v829 = vmul.f32 %v828, %v827
      %v830 = vmul.f32 0.5, %v829
      %v831 = vsub.f32 1.5, %v830
      %v832 = vmul.f32 %v827, %v831
      %vm833 = vweird.f32 %v816
      %vm834 = vweird.f32 %v827
      %vm835 = vmor %vm833, %vm834
      %v836 = vsel %vm835, %v827, %v832
      %v837 = vmul.f32 %v742, 0.125
      %v838 = vmul.f32 %v743, 0.125
      %v839 = vmul.f32 %v744, 0.125
      %v840 = vmul.f32 %v745, 0.125
      %v842 = vperm.slane %v773, 0
      %v844 = vmul.f32 %v738, %v842
      %v845 = vmul.f32 %v739, %v842
      %v846 = vmul.f32 %v740, %v842
      %v847 = vmul.f32 %v741, %v842
      %v848 = vsel %vm115, %v844, 0.0
      %849 = vadd.xlane.f32.xlu0 %v848
      %v850 = vpop.xlane.xlu0 %849
      %v851 = vsel %vm115, %v845, 0.0
      %852 = vadd.xlane.f32.xlu0 %v851
      %v853 = vpop.xlane.xlu0 %852
      %v854 = vsel %vm115, %v846, 0.0
      %855 = vadd.xlane.f32.xlu0 %v854
      %v856 = vpop.xlane.xlu0 %855
      %v857 = vsel %vm115, %v847, 0.0
      %858 = vadd.xlane.f32.xlu0 %v857
      %v859 = vpop.xlane.xlu0 %858
      %v860 = vmul.f32 %v850, %v842
      %v861 = vmul.f32 %v853, %v842
      %v862 = vmul.f32 %v856, %v842
      %v863 = vmul.f32 %v859, %v842
      %v864 = vsub.f32 %v837, %v860
      %v865 = vsub.f32 %v838, %v861
      %v866 = vsub.f32 %v839, %v862
      %v867 = vsub.f32 %v840, %v863
      %v868 = vperm.slane %v826, 0
      %v869 = vmul.f32 %v738, %v868
      %v870 = vmul.f32 %v739, %v868
      %v871 = vmul.f32 %v740, %v868
      %v872 = vmul.f32 %v741, %v868
      %v873 = vsel %vm115, %v869, 0.0
      %874 = vadd.xlane.f32.xlu0 %v873
      %v875 = vpop.xlane.xlu0 %874
      %v876 = vsel %vm115, %v870, 0.0
      %877 = vadd.xlane.f32.xlu0 %v876
      %v878 = vpop.xlane.xlu0 %877
      %v879 = vsel %vm115, %v871, 0.0
      %880 = vadd.xlane.f32.xlu0 %v879
      %v881 = vpop.xlane.xlu0 %880
      %v882 = vsel %vm115, %v872, 0.0
      %883 = vadd.xlane.f32.xlu0 %v882
      %v884 = vpop.xlane.xlu0 %883
      %v885 = vmul.f32 %v875, %v868
      %v886 = vmul.f32 %v878, %v868
      %v887 = vmul.f32 %v881, %v868
      %v888 = vmul.f32 %v884, %v868
      %v889 = vmul.f32 %v864, %v885
      %v890 = vmul.f32 %v865, %v886
      %v891 = vmul.f32 %v866, %v887
      %v892 = vmul.f32 %v867, %v888
      %v893 = vmul.f32 %v746, 0.125
      %v894 = vmul.f32 %v747, 0.125
      %v895 = vmul.f32 %v748, 0.125
      %v896 = vmul.f32 %v749, 0.125
      %v898 = vperm.slane %v774, 0
      %v900 = vmul.f32 %v738, %v898
      %v901 = vmul.f32 %v739, %v898
      %v902 = vmul.f32 %v740, %v898
      %v903 = vmul.f32 %v741, %v898
      %v904 = vsel %vm115, %v900, 0.0
      %905 = vadd.xlane.f32.xlu0 %v904
      %v906 = vpop.xlane.xlu0 %905
      %v907 = vsel %vm115, %v901, 0.0
      %908 = vadd.xlane.f32.xlu0 %v907
      %v909 = vpop.xlane.xlu0 %908
      %v910 = vsel %vm115, %v902, 0.0
      %911 = vadd.xlane.f32.xlu0 %v910
      %v912 = vpop.xlane.xlu0 %911
      %v913 = vsel %vm115, %v903, 0.0
      %914 = vadd.xlane.f32.xlu0 %v913
      %v915 = vpop.xlane.xlu0 %914
      %v916 = vmul.f32 %v906, %v898
      %v917 = vmul.f32 %v909, %v898
      %v918 = vmul.f32 %v912, %v898
      %v919 = vmul.f32 %v915, %v898
      %v920 = vsub.f32 %v893, %v916
      %v921 = vsub.f32 %v894, %v917
      %v922 = vsub.f32 %v895, %v918
      %v923 = vsub.f32 %v896, %v919
      %v924 = vperm.slane %v836, 0
      %v925 = vmul.f32 %v738, %v924
      %v926 = vmul.f32 %v739, %v924
      %v927 = vmul.f32 %v740, %v924
      %v928 = vmul.f32 %v741, %v924
      %v929 = vsel %vm115, %v925, 0.0
      %930 = vadd.xlane.f32.xlu0 %v929
      %v931 = vpop.xlane.xlu0 %930
      %v932 = vsel %vm115, %v926, 0.0
      %933 = vadd.xlane.f32.xlu0 %v932
      %v934 = vpop.xlane.xlu0 %933
      %v935 = vsel %vm115, %v927, 0.0
      %936 = vadd.xlane.f32.xlu0 %v935
      %v937 = vpop.xlane.xlu0 %936
      %v938 = vsel %vm115, %v928, 0.0
      %939 = vadd.xlane.f32.xlu0 %v938
      %v940 = vpop.xlane.xlu0 %939
      %v941 = vmul.f32 %v931, %v924
      %v942 = vmul.f32 %v934, %v924
      %v943 = vmul.f32 %v937, %v924
      %v944 = vmul.f32 %v940, %v924
      %v945 = vmul.f32 %v920, %v941
      %v946 = vmul.f32 %v921, %v942
      %v947 = vmul.f32 %v922, %v943
      %v948 = vmul.f32 %v923, %v944
      %v949 = vmul.f32 %v770, 0.125
      %v950 = vmul.f32 %v773, %v774
      %v951 = vsub.f32 %v949, %v950
      %v952 = vmul.f32 %v951, %v826
      %v953 = vmul.f32 %v952, %v836
      %v954 = vsel %vm708, %v953, 0.0
      %955 = vadd.xlane.f32.xlu0 %v954
      %v956 = vpop.xlane.xlu0 %955
      %v957 = vrot.slane %v956, 4
      %v958 = vadd.f32 %v956, %v957
      %v959 = vrot.slane %v958, 2
      %v960 = vadd.f32 %v958, %v959
      %v961 = vrot.slane %v960, 1
      %v962 = vadd.f32 %v960, %v961
      %s963 = vtos %v962
      %v964 = vmul.f32 %v889, %v738
      %v965 = vmul.f32 %v890, %v739
      %v966 = vmul.f32 %v891, %v740
      %v967 = vmul.f32 %v892, %v741
      %v968 = vsel %vm115, %v964, 0.0
      %v969 = vsel %vm115, %v965, 0.0
      %v970 = vadd.f32 %v968, %v969
      %v971 = vsel %vm115, %v966, 0.0
      %v972 = vadd.f32 %v970, %v971
      %v973 = vsel %vm115, %v967, 0.0
      %v974 = vadd.f32 %v972, %v973
      %975 = vadd.xlane.f32.xlu0 %v974
      %v976 = vpop.xlane.xlu0 %975
      %v977 = vrot.slane %v976, 4
      %v978 = vadd.f32 %v976, %v977
      %v979 = vrot.slane %v978, 2
      %v980 = vadd.f32 %v978, %v979
      %v981 = vrot.slane %v980, 1
      %v982 = vadd.f32 %v980, %v981
      %s983 = vtos %v982
      %v984 = vmul.f32 %v945, %v738
      %v985 = vmul.f32 %v946, %v739
      %v986 = vmul.f32 %v947, %v740
      %v987 = vmul.f32 %v948, %v741
      %v988 = vsel %vm115, %v984, 0.0
      %v989 = vsel %vm115, %v985, 0.0
      %v990 = vadd.f32 %v988, %v989
      %v991 = vsel %vm115, %v986, 0.0
      %v992 = vadd.f32 %v990, %v991
      %v993 = vsel %vm115, %v987, 0.0
      %v994 = vadd.f32 %v992, %v993
      %995 = vadd.xlane.f32.xlu0 %v994
      %v996 = vpop.xlane.xlu0 %995
      %v997 = vrot.slane %v996, 4
      %v998 = vadd.f32 %v996, %v997
      %v999 = vrot.slane %v998, 2
      %v1000 = vadd.f32 %v998, %v999
      %v1001 = vrot.slane %v1000, 1
      %v1002 = vadd.f32 %v1000, %v1001
      %s1003 = vtos %v1002
      %v1004 = vmul.f32 %v889, %v889
      %v1005 = vmul.f32 %v890, %v890
      %v1006 = vmul.f32 %v891, %v891
      %v1007 = vmul.f32 %v892, %v892
      %v1008 = vsel %vm115, %v1004, 0.0
      %v1009 = vsel %vm115, %v1005, 0.0
      %v1010 = vadd.f32 %v1008, %v1009
      %v1011 = vsel %vm115, %v1006, 0.0
      %v1012 = vadd.f32 %v1010, %v1011
      %v1013 = vsel %vm115, %v1007, 0.0
      %v1014 = vadd.f32 %v1012, %v1013
      %1015 = vadd.xlane.f32.xlu0 %v1014
      %v1016 = vpop.xlane.xlu0 %1015
      %v1017 = vrot.slane %v1016, 4
      %v1018 = vadd.f32 %v1016, %v1017
      %v1019 = vrot.slane %v1018, 2
      %v1020 = vadd.f32 %v1018, %v1019
      %v1021 = vrot.slane %v1020, 1
      %v1022 = vadd.f32 %v1020, %v1021
      %s1023 = vtos %v1022
      %s1024 = smul.f32 %s983, 2.0
      %s1025 = ssub.f32 %s1023, %s1024
      %s1026 = sadd.f32 %s1025, 32.0
      %v1027 = vmul.f32 %v945, %v945
      %v1028 = vmul.f32 %v946, %v946
      %v1029 = vmul.f32 %v947, %v947
      %v1030 = vmul.f32 %v948, %v948
      %v1031 = vsel %vm115, %v1027, 0.0
      %v1032 = vsel %vm115, %v1028, 0.0
      %v1033 = vadd.f32 %v1031, %v1032
      %v1034 = vsel %vm115, %v1029, 0.0
      %v1035 = vadd.f32 %v1033, %v1034
      %v1036 = vsel %vm115, %v1030, 0.0
      %v1037 = vadd.f32 %v1035, %v1036
      %1038 = vadd.xlane.f32.xlu0 %v1037
      %v1039 = vpop.xlane.xlu0 %1038
      %v1040 = vrot.slane %v1039, 4
      %v1041 = vadd.f32 %v1039, %v1040
      %v1042 = vrot.slane %v1041, 2
      %v1043 = vadd.f32 %v1041, %v1042
      %v1044 = vrot.slane %v1043, 1
      %v1045 = vadd.f32 %v1043, %v1044
      %s1046 = vtos %v1045
      %s1047 = smul.f32 %s1003, 2.0
      %s1048 = ssub.f32 %s1046, %s1047
      %s1049 = sadd.f32 %s1048, 32.0
      %s1050 = ssub.f32 0.0, %s963
      %s1051 = sadd.f32 %s1026, %s1049
      %s1052 = smul.f32 %s1051, 1e-05
      %s1053 = sadd.f32 %s1050, %s1052
      %s1054 = scalar_lea.smem [#allocation11], 0
      %1055 = sst [smem:[%s1054]] %s1053
    $region25: #{tpu_custom_call.1} parent=1 // pred_fallthru
      _
    // Predicated region
    $region26: #{tpu_custom_call.1} parent=1 // pred_check
      _
    $region27: #{tpu_custom_call.1} parent=1 // pred_check_branch
      %1057 = sbr.rel (0) target = $region29
    $region28: #{tpu_custom_call.1} parent=1 // pred_region
      %1059 = vsyncadd [#allocation8], 0
      %s1061 = sshll.u32 %s2, 4
      %s1062 = int_to_ptr.hbm [resolvable:$true] %s1061
      %1064 = dma.smem_to_hbm [#allocation11], 16, %s1062, [#allocation8]
    $region29: #{tpu_custom_call.1} parent=1 // pred_fallthru
      _
    // Predicated region
    $region30: #{tpu_custom_call.1} parent=1 // pred_check
      _
    $region31: #{tpu_custom_call.1} parent=1 // pred_check_branch
      %1066 = sbr.rel (0) target = $region33
    $region32: #{tpu_custom_call.1} parent=1 // pred_region
      %1068 = dma.done [#allocation8], 16
    $region33: #{tpu_custom_call.1} parent=1 // pred_fallthru
      _
    %1069 = sfence
    %1070 = vsyncpa [#allocation7], 1
    %1071 = vsyncpa [#allocation10], 1
    %1072 = vsyncpa [#allocation8], 1

</llo_original>
